<compile_context>
chip_gen: v5e
topology: v5e:2x2
jax: 0.10.0
libtpu: 0.0.40
codegen_flags: <defaults>
</compile_context>

<pallas_src>
import functools

import jax
import jax.numpy as jnp
from jax.experimental import pallas as pl
from jax.experimental.pallas import tpu as pltpu


# ----------------------------------------------------------------------------
# Fused transformer-encoder-stack Pallas kernel
# ----------------------------------------------------------------------------

def _layernorm(x, g, b, eps=1e-5):
    mu = jnp.mean(x, axis=-1, keepdims=True)
    d = x - mu
    var = jnp.mean(d * d, axis=-1, keepdims=True)
    return d * jax.lax.rsqrt(var + eps) * g + b


def _stack_kernel(x_ref, bias_ref,
                  wqkv_ref, bqkv_ref, wo_ref, bo_ref,
                  ln1g_ref, ln1b_ref,
                  w1_ref, b1_ref, w2_ref, b2_ref,
                  ln2g_ref, ln2b_ref,
                  o_ref, *, num_heads, batch_block, seq_len):
    """One grid step = one (batch block, encoder layer).

    Post-norm nn.TransformerEncoderLayer (batch_first, eval / dropout off).
    The [Bb*T, D] residual stream stays resident in the revisited output block
    across the whole layer axis.
    """
    layer = pl.program_id(1)

    @pl.when(layer == 0)
    def _():
        o_ref[...] = x_ref[...]

    Bb, T, H = batch_block, seq_len, num_heads
    D = o_ref.shape[1]
    dh = D // H

    x = o_ref[...]                                   # [Bb*T, D] f32 residual

    # --- packed QKV in-projection (1/sqrt(dh) pre-folded into Q columns) ----
    qkv = jnp.dot(x.astype(jnp.bfloat16), wqkv_ref[0],
                  preferred_element_type=jnp.float32) + bqkv_ref[0]
    qkv = qkv.astype(jnp.bfloat16)                   # single cast for q/k/v

    # --- self-attention: per-batch, heads statically unrolled ---------------
    attn_rows = []
    for b in range(Bb):
        r0 = b * T
        bias_b = bias_ref[b]                         # [1, T] additive key bias
        scores = []
        for h in range(H):
            q = qkv[r0:r0 + T, h * dh:(h + 1) * dh]
            k = qkv[r0:r0 + T, D + h * dh:D + (h + 1) * dh]
            scores.append(jax.lax.dot_general(
                q, k, (((1,), (1,)), ((), ())),
                preferred_element_type=jnp.float32))          # [T, T] = q @ k^T

        # One softmax over all heads (stacked along sublanes): per-row max /
        # exp / sum are still per-(head, query) row, so this is exact.
        s = jnp.concatenate(scores, axis=0) + bias_b          # [H*T, T]
        s = s - jnp.max(s, axis=-1, keepdims=True)
        p = jnp.exp(s)
        denom = jnp.sum(p, axis=-1, keepdims=True)
        p = (p * pl.reciprocal(denom, approx=True)).astype(jnp.bfloat16)

        heads = []
        for h in range(H):
            v = qkv[r0:r0 + T, 2 * D + h * dh:2 * D + (h + 1) * dh]
            heads.append(jnp.dot(p[h * T:(h + 1) * T, :], v,
                                 preferred_element_type=jnp.float32))
        attn_rows.append(jnp.concatenate(heads, axis=-1))     # [T, D], in vregs
    attn = attn_rows[0] if Bb == 1 else jnp.concatenate(attn_rows, axis=0)

    attn = jnp.dot(attn.astype(jnp.bfloat16), wo_ref[0],
                   preferred_element_type=jnp.float32) + bo_ref[0]

    # post-norm residual 1
    x = _layernorm(x + attn, ln1g_ref[0], ln1b_ref[0])

    # --- feed-forward (GELU) -------------------------------------------------
    h1 = jnp.dot(x.astype(jnp.bfloat16), w1_ref[0],
                 preferred_element_type=jnp.float32) + b1_ref[0]
    # TODO(synk): PyTorch uses exact erf-GELU; tanh approximation used here.
    h1 = jax.nn.gelu(h1, approximate=True)
    h2 = jnp.dot(h1.astype(jnp.bfloat16), w2_ref[0],
                 preferred_element_type=jnp.float32) + b2_ref[0]

    # post-norm residual 2
    o_ref[...] = _layernorm(x + h2, ln2g_ref[0], ln2b_ref[0]).astype(o_ref.dtype)


def transformer_stack(x, key_bias, sp, num_heads, *, batch_blocks=1):
    """Fused TransformerEncoder stack.

    x:            [B, T, D] f32 token sequence (after positional encoding)
    key_bias:     [B, 1, T] f32 additive key-padding bias (0 or -1e9)
    sp:           dict of stacked per-layer params (leading dim = n_layers)
    batch_blocks: number of batch blocks along the "parallel" grid axis.
                  1 (default) = whole batch in one block (best for single-TC
                  v5e/v6e).  Use 2 on v7x megacore when (B/2)*T % 8 == 0.
    """
    B, T, D = x.shape
    nl = sp["w1"].shape[0]
    assert B % batch_blocks == 0
    Bb = B // batch_blocks
    x2 = x.reshape(B * T, D)          # flatten outside the kernel (free in XLA)

    def xmap(bb, l):
        return (bb, 0)

    def bmap(bb, l):
        return (bb, 0, 0)

    def wmap(bb, l):
        return (l, 0, 0)

    def wspec(arr):
        return pl.BlockSpec((1,) + arr.shape[1:], wmap)

    kernel = functools.partial(_stack_kernel, num_heads=num_heads,
                               batch_block=Bb, seq_len=T)
    out2 = pl.pallas_call(
        kernel,
        out_shape=jax.ShapeDtypeStruct((B * T, D), jnp.float32),
        grid=(batch_blocks, nl),
        in_specs=[
            pl.BlockSpec((Bb * T, D), xmap),
            pl.BlockSpec((Bb, 1, T), bmap),
            wspec(sp["wqkv"]), wspec(sp["bqkv"]),
            wspec(sp["wo"]), wspec(sp["bo"]),
            wspec(sp["ln1_g"]), wspec(sp["ln1_b"]),
            wspec(sp["w1"]), wspec(sp["b1"]),
            wspec(sp["w2"]), wspec(sp["b2"]),
            wspec(sp["ln2_g"]), wspec(sp["ln2_b"]),
        ],
        out_specs=pl.BlockSpec((Bb * T, D), xmap),
        compiler_params=pltpu.CompilerParams(
            dimension_semantics=("parallel", "arbitrary"),
            vmem_limit_bytes=32 * 1024 * 1024,   # conservative for v7x (64 MiB phys)
        ),
    )(
        x2, key_bias,
        sp["wqkv"], sp["bqkv"], sp["wo"], sp["bo"],
        sp["ln1_g"], sp["ln1_b"],
        sp["w1"], sp["b1"], sp["w2"], sp["b2"],
        sp["ln2_g"], sp["ln2_b"],
    )
    return out2.reshape(B, T, D)


# ----------------------------------------------------------------------------
# Parameter construction (deterministic, synthetic)
# ----------------------------------------------------------------------------

def sinusoidal_table(max_len, dim):
    pos = jnp.arange(max_len, dtype=jnp.float32)[:, None]
    div = jnp.exp(jnp.arange(0, dim, 2, dtype=jnp.float32) * (-jnp.log(10000.0) / dim))
    pe = jnp.zeros((max_len, dim), jnp.float32)
    pe = pe.at[:, 0::2].set(jnp.sin(pos * div))
    pe = pe.at[:, 1::2].set(jnp.cos(pos * div))
    return pe


def init_linear(key, k_in, k_out, scale=0.02):
    w = scale * jax.random.normal(key, (k_in, k_out), jnp.float32)
    b = jnp.zeros((k_out,), jnp.float32)
    return w, b


def init_stacked_layers(key, n_layers, d, f, num_heads):
    ks = jax.random.split(key, 4)
    dh = d // num_heads
    scale = jnp.float32(1.0 / (dh ** 0.5))

    # Packed in-projection (q|k|v) — matches PyTorch's single in_proj_weight.
    wqkv = 0.02 * jax.random.normal(ks[0], (n_layers, d, 3 * d), jnp.float32)
    bqkv = jnp.zeros((n_layers, 1, 3 * d), jnp.float32)
    # Fold the 1/sqrt(dh) attention scale into the Q columns at build time.
    wqkv = wqkv.at[:, :, :d].multiply(scale)
    bqkv = bqkv.at[:, :, :d].multiply(scale)

    sp = {
        "wqkv": wqkv, "bqkv": bqkv,
        "wo": 0.02 * jax.random.normal(ks[1], (n_layers, d, d), jnp.float32),
        "bo": jnp.zeros((n_layers, 1, d), jnp.float32),
        "ln1_g": jnp.ones((n_layers, 1, d), jnp.float32),
        "ln1_b": jnp.zeros((n_layers, 1, d), jnp.float32),
        "w1": 0.02 * jax.random.normal(ks[2], (n_layers, d, f), jnp.float32),
        "b1": jnp.zeros((n_layers, 1, f), jnp.float32),
        "w2": 0.02 * jax.random.normal(ks[3], (n_layers, f, d), jnp.float32),
        "b2": jnp.zeros((n_layers, 1, d), jnp.float32),
        "ln2_g": jnp.ones((n_layers, 1, d), jnp.float32),
        "ln2_b": jnp.zeros((n_layers, 1, d), jnp.float32),
    }
    # Matmul weights cast to bf16 ONCE (halves weight DMA bytes, 2x MXU
    # throughput on v6e/v7x). Biases / LayerNorm params stay f32.
    for name in ("wqkv", "wo", "w1", "w2"):
        sp[name] = sp[name].astype(jnp.bfloat16)
    return sp


def init_cmdm_params(key, *, motion_dim, latent_dim, time_emb_dim, text_feat_dim,
                     contact_dim, planes, num_heads, dim_feedforward, num_layers):
    keys = jax.random.split(key, 16)
    params = {"num_heads": num_heads}

    # TimestepEmbedder: sinusoidal PE (max_len=1000) -> Linear -> SiLU -> Linear
    params["ts_pe"] = sinusoidal_table(1000, latent_dim)
    params["ts_w1"], params["ts_b1"] = init_linear(keys[0], latent_dim, time_emb_dim)
    params["ts_w2"], params["ts_b2"] = init_linear(keys[1], time_emb_dim, latent_dim)

    # language / motion / contact adapters, motion output head
    params["lang_w"], params["lang_b"] = init_linear(keys[2], text_feat_dim, latent_dim)
    params["mot_w"], params["mot_b"] = init_linear(keys[3], motion_dim, latent_dim)
    params["cadpt_w"], params["cadpt_b"] = init_linear(keys[4], planes[-1], latent_dim)
    params["out_w"], params["out_b"] = init_linear(keys[5], latent_dim, motion_dim)

    # simplified SceneMapEncoder: per-point MLP over (xyz ++ contact) + max-pool
    # TODO(synk): exact SceneMapEncoder (conv blocks over point grids) is external
    # code; replaced with a PointNet-style pointwise MLP producing [B,1,planes[-1]].
    dims = [3 + contact_dim] + list(planes)
    params["pc_w"], params["pc_b"] = [], []
    for i in range(len(planes)):
        w, b = init_linear(keys[6 + i], dims[i], dims[i + 1])
        params["pc_w"].append(w)
        params["pc_b"].append(b)

    # positional encoding for the concatenated sequence
    params["seq_pe"] = sinusoidal_table(5000, latent_dim)

    # transformer encoder stack (sum(num_layers) layers), weights stacked per-layer
    params["stack"] = init_stacked_layers(keys[15], sum(num_layers),
                                          latent_dim, dim_feedforward, num_heads)
    return params


# ----------------------------------------------------------------------------
# Forward pass (trans_enc arch, mask_motion=True, eval mode / dropout off)
# ----------------------------------------------------------------------------

def cmdm_forward(params, x, timesteps, c_text_feat, c_pc_xyz, c_pc_contact, x_mask):
    B, L, _ = x.shape

    # --- timestep embedding (tiny: plain XLA) -----------------------------------
    t = params["ts_pe"][timesteps]                                   # [B, D]
    t = jax.nn.silu(t @ params["ts_w1"] + params["ts_b1"])
    time_emb = (t @ params["ts_w2"] + params["ts_b2"])[:, None, :]   # [B,1,D]
    time_mask = jnp.zeros((B, 1), jnp.bool_)

    # --- text embedding (precomputed frozen text features) ----------------------
    text_emb = c_text_feat[:, None, :].astype(jnp.float32)           # [B,1,Ft]
    text_emb = text_emb @ params["lang_w"] + params["lang_b"]        # [B,1,D]
    text_mask = jnp.zeros((B, 1), jnp.bool_)

    # --- contact encoder (simplified PointNet) + contact_adapter ----------------
    feat = jnp.concatenate([c_pc_xyz, c_pc_contact], axis=-1)        # [B,N,3+Cc]
    for w, b in zip(params["pc_w"], params["pc_b"]):
        feat = jax.nn.relu(feat @ w + b)
    cont = jnp.max(feat, axis=1, keepdims=True)                      # [B,1,planes[-1]]
    cont_mask = jnp.zeros((B, cont.shape[1]), jnp.bool_)
    cont_emb = cont @ params["cadpt_w"] + params["cadpt_b"]          # [B,1,D]

    # --- motion adapter ----------------------------------------------------------
    xm = x @ params["mot_w"] + params["mot_b"]                       # [B,L,D]

    # --- concat tokens, positional encoding, padding mask ------------------------
    seq = jnp.concatenate([time_emb, text_emb, cont_emb, xm], axis=1)  # [B,T,D]
    T = seq.shape[1]
    seq = seq + params["seq_pe"][:T][None]            # PositionalEncoding (dropout off)
    pad = jnp.concatenate([time_mask, text_mask, cont_mask, x_mask], axis=1)  # [B,T]
    key_bias = (pad.astype(jnp.float32) * jnp.float32(-1e9))[:, None, :]      # [B,1,T]

    # --- fused Pallas transformer encoder stack ----------------------------------
    seq = transformer_stack(seq.astype(jnp.float32), key_bias,
                            params["stack"], params["num_heads"])

    # --- drop non-motion tokens, project back to motion space --------------------
    non_motion = time_mask.shape[1] + text_mask.shape[1] + cont_mask.shape[1]
    out = seq[:, non_motion:, :] @ params["out_w"] + params["out_b"]  # [B,L,motion_dim]
    return out


# ----------------------------------------------------------------------------
# Demo
# ----------------------------------------------------------------------------

if __name__ == "__main__":
    B, L = 2, 8
    MOTION_DIM = 12
    LATENT_DIM = 32
    TIME_EMB_DIM = 64
    TEXT_FEAT_DIM = 16
    CONTACT_DIM = 4
    N_POINTS = 16
    PLANES = [8, 16, 32]
    NUM_HEADS = 4
    DIM_FF = 64
    NUM_LAYERS = [1, 1]   # sum -> 2 encoder layers

    root = jax.random.PRNGKey(0)
    kp, kx, kt, ktxt, kxyz, kc = jax.random.split(root, 6)

    params = init_cmdm_params(
        kp, motion_dim=MOTION_DIM, latent_dim=LATENT_DIM, time_emb_dim=TIME_EMB_DIM,
        text_feat_dim=TEXT_FEAT_DIM, contact_dim=CONTACT_DIM, planes=PLANES,
        num_heads=NUM_HEADS, dim_feedforward=DIM_FF, num_layers=NUM_LAYERS,
    )

    x = jax.random.normal(kx, (B, L, MOTION_DIM), jnp.float32)
    timesteps = jax.random.randint(kt, (B,), 0, 1000)
    c_text_feat = jax.random.normal(ktxt, (B, TEXT_FEAT_DIM), jnp.float32)
    c_pc_xyz = jax.random.normal(kxyz, (B, N_POINTS, 3), jnp.float32)
    c_pc_contact = jax.random.normal(kc, (B, N_POINTS, CONTACT_DIM), jnp.float32)
    # mask the last two motion tokens of the second batch element
    x_mask = jnp.zeros((B, L), jnp.bool_).at[1, -2:].set(True)

    out = cmdm_forward(params, x, timesteps, c_text_feat, c_pc_xyz, c_pc_contact, x_mask)
    out = jax.block_until_ready(out)
    assert out.shape == (B, L, MOTION_DIM), out.shape
    assert jnp.all(jnp.isfinite(out))
    print("KERNEL_OK")
</pallas_src>

<mosaic_0001>
module attributes {stable_mosaic.version = 11 : i64} {
  func.func @_stack_kernel(%arg0: i32, %arg1: i32, %arg2: memref<22x32xf32, #tpu.memory_space<vmem>>, %arg3: memref<2x1x11xf32, #tpu.memory_space<vmem>>, %arg4: memref<1x32x96xbf16, #tpu.memory_space<vmem>>, %arg5: memref<1x1x96xf32, #tpu.memory_space<vmem>>, %arg6: memref<1x32x32xbf16, #tpu.memory_space<vmem>>, %arg7: memref<1x1x32xf32, #tpu.memory_space<vmem>>, %arg8: memref<1x1x32xf32, #tpu.memory_space<vmem>>, %arg9: memref<1x1x32xf32, #tpu.memory_space<vmem>>, %arg10: memref<1x32x64xbf16, #tpu.memory_space<vmem>>, %arg11: memref<1x1x64xf32, #tpu.memory_space<vmem>>, %arg12: memref<1x64x32xbf16, #tpu.memory_space<vmem>>, %arg13: memref<1x1x32xf32, #tpu.memory_space<vmem>>, %arg14: memref<1x1x32xf32, #tpu.memory_space<vmem>>, %arg15: memref<1x1x32xf32, #tpu.memory_space<vmem>>, %arg16: memref<22x32xf32, #tpu.memory_space<vmem>>) attributes {dimension_semantics = [#tpu.dimension_semantics<parallel>, #tpu.dimension_semantics<arbitrary>], iteration_bounds = array<i64: 1, 2>, scalar_prefetch = 0 : i64, scratch_operands = 0 : i64, tpu.core_type = #tpu.core_type<tc>, window_params = [{transform_indices = @transform_0, window_bounds = array<i64: 22, 32>}, {transform_indices = @transform_1, window_bounds = array<i64: 2, 1, 11>}, {transform_indices = @transform_2, window_bounds = array<i64: 1, 32, 96>}, {transform_indices = @transform_3, window_bounds = array<i64: 1, 1, 96>}, {transform_indices = @transform_4, window_bounds = array<i64: 1, 32, 32>}, {transform_indices = @transform_5, window_bounds = array<i64: 1, 1, 32>}, {transform_indices = @transform_6, window_bounds = array<i64: 1, 1, 32>}, {transform_indices = @transform_7, window_bounds = array<i64: 1, 1, 32>}, {transform_indices = @transform_8, window_bounds = array<i64: 1, 32, 64>}, {transform_indices = @transform_9, window_bounds = array<i64: 1, 1, 64>}, {transform_indices = @transform_10, window_bounds = array<i64: 1, 64, 32>}, {transform_indices = @transform_11, window_bounds = array<i64: 1, 1, 32>}, {transform_indices = @transform_12, window_bounds = array<i64: 1, 1, 32>}, {transform_indices = @transform_13, window_bounds = array<i64: 1, 1, 32>}, {transform_indices = @transform_14, window_bounds = array<i64: 22, 32>}]} {
    %c0_i32 = arith.constant 0 : i32
    %0 = arith.cmpi eq, %arg1, %c0_i32 : i32
    %1 = arith.extui %0 : i1 to i32
    %c0_i32_0 = arith.constant 0 : i32
    %2 = arith.cmpi ne, %1, %c0_i32_0 : i32
    scf.if %2 {
      %c0_82 = arith.constant 0 : index
      %c0_83 = arith.constant 0 : index
      %184 = vector.load %arg2[%c0_82, %c0_83] : memref<22x32xf32, #tpu.memory_space<vmem>>, vector<22x32xf32>
      %c0_84 = arith.constant 0 : index
      %c0_85 = arith.constant 0 : index
      %185 = vector.load %arg16[%c0_84, %c0_85] : memref<22x32xf32, #tpu.memory_space<vmem>>, vector<22x32xf32>
      tpu.vector_store %arg16[%c0_84, %c0_85], %184 {strides = array<i32>} : memref<22x32xf32, #tpu.memory_space<vmem>>, vector<22x32xf32>,
    } else {
    }
    %c0 = arith.constant 0 : index
    %c0_1 = arith.constant 0 : index
    %3 = vector.load %arg16[%c0, %c0_1] : memref<22x32xf32, #tpu.memory_space<vmem>>, vector<22x32xf32>
    %4 = arith.truncf %3 : vector<22x32xf32> to vector<22x32xbf16>
    %c0_2 = arith.constant 0 : index
    %c0_3 = arith.constant 0 : index
    %c0_4 = arith.constant 0 : index
    %5 = vector.load %arg4[%c0_2, %c0_3, %c0_4] : memref<1x32x96xbf16, #tpu.memory_space<vmem>>, vector<1x32x96xbf16>
    %6 = vector.shape_cast %5 : vector<1x32x96xbf16> to vector<32x96xbf16>
    %cst = arith.constant dense<0.000000e+00> : vector<22x96xf32>
    %7 = tpu.matmul %4, %6, %cst {dimension_numbers = #tpu.dot_dimension_numbers<[1], [0], [0], [1], [0, 0, 1, 1], [], []>} : vector<22x32xbf16>, vector<32x96xbf16>, vector<22x96xf32> -> vector<22x96xf32>
    %c0_5 = arith.constant 0 : index
    %c0_6 = arith.constant 0 : index
    %c0_7 = arith.constant 0 : index
    %8 = vector.load %arg5[%c0_5, %c0_6, %c0_7] : memref<1x1x96xf32, #tpu.memory_space<vmem>>, vector<1x1x96xf32>
    %9 = vector.shape_cast %8 : vector<1x1x96xf32> to vector<1x96xf32>
    %10 = vector.broadcast %9 : vector<1x96xf32> to vector<22x96xf32>
    %11 = arith.addf %7, %10 : vector<22x96xf32>
    %12 = arith.truncf %11 : vector<22x96xf32> to vector<22x96xbf16>
    %c0_8 = arith.constant 0 : index
    %c0_9 = arith.constant 0 : index
    %c0_10 = arith.constant 0 : index
    %13 = vector.load %arg3[%c0_8, %c0_9, %c0_10] : memref<2x1x11xf32, #tpu.memory_space<vmem>>, vector<1x1x11xf32>
    %14 = vector.shape_cast %13 : vector<1x1x11xf32> to vector<1x11xf32>
    %15 = vector.extract_strided_slice %12 {offsets = [0, 0], sizes = [11, 8], strides = [1, 1]} : vector<22x96xbf16> to vector<11x8xbf16>
    %16 = vector.extract_strided_slice %12 {offsets = [0, 32], sizes = [11, 8], strides = [1, 1]} : vector<22x96xbf16> to vector<11x8xbf16>
    %cst_11 = arith.constant dense<0.000000e+00> : vector<11x11xf32>
    %17 = tpu.matmul %15, %16, %cst_11 {dimension_numbers = #tpu.dot_dimension_numbers<[1], [1], [0], [0], [0, 0, 1, 0], [], []>} : vector<11x8xbf16>, vector<11x8xbf16>, vector<11x11xf32> -> vector<11x11xf32>
    %18 = vector.extract_strided_slice %12 {offsets = [0, 8], sizes = [11, 8], strides = [1, 1]} : vector<22x96xbf16> to vector<11x8xbf16>
    %19 = vector.extract_strided_slice %12 {offsets = [0, 40], sizes = [11, 8], strides = [1, 1]} : vector<22x96xbf16> to vector<11x8xbf16>
    %cst_12 = arith.constant dense<0.000000e+00> : vector<11x11xf32>
    %20 = tpu.matmul %18, %19, %cst_12 {dimension_numbers = #tpu.dot_dimension_numbers<[1], [1], [0], [0], [0, 0, 1, 0], [], []>} : vector<11x8xbf16>, vector<11x8xbf16>, vector<11x11xf32> -> vector<11x11xf32>
    %21 = vector.extract_strided_slice %12 {offsets = [0, 16], sizes = [11, 8], strides = [1, 1]} : vector<22x96xbf16> to vector<11x8xbf16>
    %22 = vector.extract_strided_slice %12 {offsets = [0, 48], sizes = [11, 8], strides = [1, 1]} : vector<22x96xbf16> to vector<11x8xbf16>
    %cst_13 = arith.constant dense<0.000000e+00> : vector<11x11xf32>
    %23 = tpu.matmul %21, %22, %cst_13 {dimension_numbers = #tpu.dot_dimension_numbers<[1], [1], [0], [0], [0, 0, 1, 0], [], []>} : vector<11x8xbf16>, vector<11x8xbf16>, vector<11x11xf32> -> vector<11x11xf32>
    %24 = vector.extract_strided_slice %12 {offsets = [0, 24], sizes = [11, 8], strides = [1, 1]} : vector<22x96xbf16> to vector<11x8xbf16>
    %25 = vector.extract_strided_slice %12 {offsets = [0, 56], sizes = [11, 8], strides = [1, 1]} : vector<22x96xbf16> to vector<11x8xbf16>
    %cst_14 = arith.constant dense<0.000000e+00> : vector<11x11xf32>
    %26 = tpu.matmul %24, %25, %cst_14 {dimension_numbers = #tpu.dot_dimension_numbers<[1], [1], [0], [0], [0, 0, 1, 0], [], []>} : vector<11x8xbf16>, vector<11x8xbf16>, vector<11x11xf32> -> vector<11x11xf32>
    %27 = tpu.concatenate %17, %20, %23, %26 in 0 : vector<11x11xf32>, vector<11x11xf32>, vector<11x11xf32>, vector<11x11xf32> -> vector<44x11xf32>
    %28 = vector.broadcast %14 : vector<1x11xf32> to vector<44x11xf32>
    %29 = arith.addf %27, %28 : vector<44x11xf32>
    %cst_15 = arith.constant dense<0xFF800000> : vector<44xf32>
    %30 = vector.multi_reduction <maximumf>, %29, %cst_15 [1] : vector<44x11xf32> to vector<44xf32>
    %31 = vector.shape_cast %30 : vector<44xf32> to vector<44x1xf32>
    %32 = vector.broadcast %31 : vector<44x1xf32> to vector<44x11xf32>
    %33 = arith.subf %29, %32 : vector<44x11xf32>
    %34 = math.exp %33 : vector<44x11xf32>
    %cst_16 = arith.constant dense<0.000000e+00> : vector<44xf32>
    %35 = vector.multi_reduction <add>, %34, %cst_16 [1] : vector<44x11xf32> to vector<44xf32>
    %36 = vector.shape_cast %35 : vector<44xf32> to vector<44x1xf32>
    %37 = tpu.reciprocal %36 {approx = true} : vector<44x1xf32> -> vector<44x1xf32>
    %38 = vector.broadcast %37 : vector<44x1xf32> to vector<44x11xf32>
    %39 = arith.mulf %34, %38 : vector<44x11xf32>
    %40 = arith.truncf %39 : vector<44x11xf32> to vector<44x11xbf16>
    %41 = vector.extract_strided_slice %12 {offsets = [0, 64], sizes = [11, 8], strides = [1, 1]} : vector<22x96xbf16> to vector<11x8xbf16>
    %42 = vector.extract_strided_slice %40 {offsets = [0, 0], sizes = [11, 11], strides = [1, 1]} : vector<44x11xbf16> to vector<11x11xbf16>
    %cst_17 = arith.constant dense<0.000000e+00> : vector<11x8xf32>
    %43 = tpu.matmul %42, %41, %cst_17 {dimension_numbers = #tpu.dot_dimension_numbers<[1], [0], [0], [1], [0, 0, 1, 1], [], []>} : vector<11x11xbf16>, vector<11x8xbf16>, vector<11x8xf32> -> vector<11x8xf32>
    %44 = vector.extract_strided_slice %12 {offsets = [0, 72], sizes = [11, 8], strides = [1, 1]} : vector<22x96xbf16> to vector<11x8xbf16>
    %45 = vector.extract_strided_slice %40 {offsets = [11, 0], sizes = [11, 11], strides = [1, 1]} : vector<44x11xbf16> to vector<11x11xbf16>
    %cst_18 = arith.constant dense<0.000000e+00> : vector<11x8xf32>
    %46 = tpu.matmul %45, %44, %cst_18 {dimension_numbers = #tpu.dot_dimension_numbers<[1], [0], [0], [1], [0, 0, 1, 1], [], []>} : vector<11x11xbf16>, vector<11x8xbf16>, vector<11x8xf32> -> vector<11x8xf32>
    %47 = vector.extract_strided_slice %12 {offsets = [0, 80], sizes = [11, 8], strides = [1, 1]} : vector<22x96xbf16> to vector<11x8xbf16>
    %48 = vector.extract_strided_slice %40 {offsets = [22, 0], sizes = [11, 11], strides = [1, 1]} : vector<44x11xbf16> to vector<11x11xbf16>
    %cst_19 = arith.constant dense<0.000000e+00> : vector<11x8xf32>
    %49 = tpu.matmul %48, %47, %cst_19 {dimension_numbers = #tpu.dot_dimension_numbers<[1], [0], [0], [1], [0, 0, 1, 1], [], []>} : vector<11x11xbf16>, vector<11x8xbf16>, vector<11x8xf32> -> vector<11x8xf32>
    %50 = vector.extract_strided_slice %12 {offsets = [0, 88], sizes = [11, 8], strides = [1, 1]} : vector<22x96xbf16> to vector<11x8xbf16>
    %51 = vector.extract_strided_slice %40 {offsets = [33, 0], sizes = [11, 11], strides = [1, 1]} : vector<44x11xbf16> to vector<11x11xbf16>
    %cst_20 = arith.constant dense<0.000000e+00> : vector<11x8xf32>
    %52 = tpu.matmul %51, %50, %cst_20 {dimension_numbers = #tpu.dot_dimension_numbers<[1], [0], [0], [1], [0, 0, 1, 1], [], []>} : vector<11x11xbf16>, vector<11x8xbf16>, vector<11x8xf32> -> vector<11x8xf32>
    %53 = tpu.concatenate %43, %46, %49, %52 in 1 : vector<11x8xf32>, vector<11x8xf32>, vector<11x8xf32>, vector<11x8xf32> -> vector<11x32xf32>
    %c1 = arith.constant 1 : index
    %c0_21 = arith.constant 0 : index
    %c0_22 = arith.constant 0 : index
    %54 = vector.load %arg3[%c1, %c0_21, %c0_22] : memref<2x1x11xf32, #tpu.memory_space<vmem>>, vector<1x1x11xf32>
    %55 = vector.shape_cast %54 : vector<1x1x11xf32> to vector<1x11xf32>
    %56 = vector.extract_strided_slice %12 {offsets = [11, 0], sizes = [11, 8], strides = [1, 1]} : vector<22x96xbf16> to vector<11x8xbf16>
    %57 = vector.extract_strided_slice %12 {offsets = [11, 32], sizes = [11, 8], strides = [1, 1]} : vector<22x96xbf16> to vector<11x8xbf16>
    %cst_23 = arith.constant dense<0.000000e+00> : vector<11x11xf32>
    %58 = tpu.matmul %56, %57, %cst_23 {dimension_numbers = #tpu.dot_dimension_numbers<[1], [1], [0], [0], [0, 0, 1, 0], [], []>} : vector<11x8xbf16>, vector<11x8xbf16>, vector<11x11xf32> -> vector<11x11xf32>
    %59 = vector.extract_strided_slice %12 {offsets = [11, 8], sizes = [11, 8], strides = [1, 1]} : vector<22x96xbf16> to vector<11x8xbf16>
    %60 = vector.extract_strided_slice %12 {offsets = [11, 40], sizes = [11, 8], strides = [1, 1]} : vector<22x96xbf16> to vector<11x8xbf16>
    %cst_24 = arith.constant dense<0.000000e+00> : vector<11x11xf32>
    %61 = tpu.matmul %59, %60, %cst_24 {dimension_numbers = #tpu.dot_dimension_numbers<[1], [1], [0], [0], [0, 0, 1, 0], [], []>} : vector<11x8xbf16>, vector<11x8xbf16>, vector<11x11xf32> -> vector<11x11xf32>
    %62 = vector.extract_strided_slice %12 {offsets = [11, 16], sizes = [11, 8], strides = [1, 1]} : vector<22x96xbf16> to vector<11x8xbf16>
    %63 = vector.extract_strided_slice %12 {offsets = [11, 48], sizes = [11, 8], strides = [1, 1]} : vector<22x96xbf16> to vector<11x8xbf16>
    %cst_25 = arith.constant dense<0.000000e+00> : vector<11x11xf32>
    %64 = tpu.matmul %62, %63, %cst_25 {dimension_numbers = #tpu.dot_dimension_numbers<[1], [1], [0], [0], [0, 0, 1, 0], [], []>} : vector<11x8xbf16>, vector<11x8xbf16>, vector<11x11xf32> -> vector<11x11xf32>
    %65 = vector.extract_strided_slice %12 {offsets = [11, 24], sizes = [11, 8], strides = [1, 1]} : vector<22x96xbf16> to vector<11x8xbf16>
    %66 = vector.extract_strided_slice %12 {offsets = [11, 56], sizes = [11, 8], strides = [1, 1]} : vector<22x96xbf16> to vector<11x8xbf16>
    %cst_26 = arith.constant dense<0.000000e+00> : vector<11x11xf32>
    %67 = tpu.matmul %65, %66, %cst_26 {dimension_numbers = #tpu.dot_dimension_numbers<[1], [1], [0], [0], [0, 0, 1, 0], [], []>} : vector<11x8xbf16>, vector<11x8xbf16>, vector<11x11xf32> -> vector<11x11xf32>
    %68 = tpu.concatenate %58, %61, %64, %67 in 0 : vector<11x11xf32>, vector<11x11xf32>, vector<11x11xf32>, vector<11x11xf32> -> vector<44x11xf32>
    %69 = vector.broadcast %55 : vector<1x11xf32> to vector<44x11xf32>
    %70 = arith.addf %68, %69 : vector<44x11xf32>
    %cst_27 = arith.constant dense<0xFF800000> : vector<44xf32>
    %71 = vector.multi_reduction <maximumf>, %70, %cst_27 [1] : vector<44x11xf32> to vector<44xf32>
    %72 = vector.shape_cast %71 : vector<44xf32> to vector<44x1xf32>
    %73 = vector.broadcast %72 : vector<44x1xf32> to vector<44x11xf32>
    %74 = arith.subf %70, %73 : vector<44x11xf32>
    %75 = math.exp %74 : vector<44x11xf32>
    %cst_28 = arith.constant dense<0.000000e+00> : vector<44xf32>
    %76 = vector.multi_reduction <add>, %75, %cst_28 [1] : vector<44x11xf32> to vector<44xf32>
    %77 = vector.shape_cast %76 : vector<44xf32> to vector<44x1xf32>
    %78 = tpu.reciprocal %77 {approx = true} : vector<44x1xf32> -> vector<44x1xf32>
    %79 = vector.broadcast %78 : vector<44x1xf32> to vector<44x11xf32>
    %80 = arith.mulf %75, %79 : vector<44x11xf32>
    %81 = arith.truncf %80 : vector<44x11xf32> to vector<44x11xbf16>
    %82 = vector.extract_strided_slice %12 {offsets = [11, 64], sizes = [11, 8], strides = [1, 1]} : vector<22x96xbf16> to vector<11x8xbf16>
    %83 = vector.extract_strided_slice %81 {offsets = [0, 0], sizes = [11, 11], strides = [1, 1]} : vector<44x11xbf16> to vector<11x11xbf16>
    %cst_29 = arith.constant dense<0.000000e+00> : vector<11x8xf32>
    %84 = tpu.matmul %83, %82, %cst_29 {dimension_numbers = #tpu.dot_dimension_numbers<[1], [0], [0], [1], [0, 0, 1, 1], [], []>} : vector<11x11xbf16>, vector<11x8xbf16>, vector<11x8xf32> -> vector<11x8xf32>
    %85 = vector.extract_strided_slice %12 {offsets = [11, 72], sizes = [11, 8], strides = [1, 1]} : vector<22x96xbf16> to vector<11x8xbf16>
    %86 = vector.extract_strided_slice %81 {offsets = [11, 0], sizes = [11, 11], strides = [1, 1]} : vector<44x11xbf16> to vector<11x11xbf16>
    %cst_30 = arith.constant dense<0.000000e+00> : vector<11x8xf32>
    %87 = tpu.matmul %86, %85, %cst_30 {dimension_numbers = #tpu.dot_dimension_numbers<[1], [0], [0], [1], [0, 0, 1, 1], [], []>} : vector<11x11xbf16>, vector<11x8xbf16>, vector<11x8xf32> -> vector<11x8xf32>
    %88 = vector.extract_strided_slice %12 {offsets = [11, 80], sizes = [11, 8], strides = [1, 1]} : vector<22x96xbf16> to vector<11x8xbf16>
    %89 = vector.extract_strided_slice %81 {offsets = [22, 0], sizes = [11, 11], strides = [1, 1]} : vector<44x11xbf16> to vector<11x11xbf16>
    %cst_31 = arith.constant dense<0.000000e+00> : vector<11x8xf32>
    %90 = tpu.matmul %89, %88, %cst_31 {dimension_numbers = #tpu.dot_dimension_numbers<[1], [0], [0], [1], [0, 0, 1, 1], [], []>} : vector<11x11xbf16>, vector<11x8xbf16>, vector<11x8xf32> -> vector<11x8xf32>
    %91 = vector.extract_strided_slice %12 {offsets = [11, 88], sizes = [11, 8], strides = [1, 1]} : vector<22x96xbf16> to vector<11x8xbf16>
    %92 = vector.extract_strided_slice %81 {offsets = [33, 0], sizes = [11, 11], strides = [1, 1]} : vector<44x11xbf16> to vector<11x11xbf16>
    %cst_32 = arith.constant dense<0.000000e+00> : vector<11x8xf32>
    %93 = tpu.matmul %92, %91, %cst_32 {dimension_numbers = #tpu.dot_dimension_numbers<[1], [0], [0], [1], [0, 0, 1, 1], [], []>} : vector<11x11xbf16>, vector<11x8xbf16>, vector<11x8xf32> -> vector<11x8xf32>
    %94 = tpu.concatenate %84, %87, %90, %93 in 1 : vector<11x8xf32>, vector<11x8xf32>, vector<11x8xf32>, vector<11x8xf32> -> vector<11x32xf32>
    %95 = tpu.concatenate %53, %94 in 0 : vector<11x32xf32>, vector<11x32xf32> -> vector<22x32xf32>
    %96 = arith.truncf %95 : vector<22x32xf32> to vector<22x32xbf16>
    %c0_33 = arith.constant 0 : index
    %c0_34 = arith.constant 0 : index
    %c0_35 = arith.constant 0 : index
    %97 = vector.load %arg6[%c0_33, %c0_34, %c0_35] : memref<1x32x32xbf16, #tpu.memory_space<vmem>>, vector<1x32x32xbf16>
    %98 = vector.shape_cast %97 : vector<1x32x32xbf16> to vector<32x32xbf16>
    %cst_36 = arith.constant dense<0.000000e+00> : vector<22x32xf32>
    %99 = tpu.matmul %96, %98, %cst_36 {dimension_numbers = #tpu.dot_dimension_numbers<[1], [0], [0], [1], [0, 0, 1, 1], [], []>} : vector<22x32xbf16>, vector<32x32xbf16>, vector<22x32xf32> -> vector<22x32xf32>
    %c0_37 = arith.constant 0 : index
    %c0_38 = arith.constant 0 : index
    %c0_39 = arith.constant 0 : index
    %100 = vector.load %arg7[%c0_37, %c0_38, %c0_39] : memref<1x1x32xf32, #tpu.memory_space<vmem>>, vector<1x1x32xf32>
    %101 = vector.shape_cast %100 : vector<1x1x32xf32> to vector<1x32xf32>
    %102 = vector.broadcast %101 : vector<1x32xf32> to vector<22x32xf32>
    %103 = arith.addf %99, %102 : vector<22x32xf32>
    %104 = arith.addf %3, %103 : vector<22x32xf32>
    %c0_40 = arith.constant 0 : index
    %c0_41 = arith.constant 0 : index
    %c0_42 = arith.constant 0 : index
    %105 = vector.load %arg8[%c0_40, %c0_41, %c0_42] : memref<1x1x32xf32, #tpu.memory_space<vmem>>, vector<1x1x32xf32>
    %106 = vector.shape_cast %105 : vector<1x1x32xf32> to vector<1x32xf32>
    %c0_43 = arith.constant 0 : index
    %c0_44 = arith.constant 0 : index
    %c0_45 = arith.constant 0 : index
    %107 = vector.load %arg9[%c0_43, %c0_44, %c0_45] : memref<1x1x32xf32, #tpu.memory_space<vmem>>, vector<1x1x32xf32>
    %108 = vector.shape_cast %107 : vector<1x1x32xf32> to vector<1x32xf32>
    %cst_46 = arith.constant dense<0.000000e+00> : vector<22xf32>
    %109 = vector.multi_reduction <add>, %104, %cst_46 [1] : vector<22x32xf32> to vector<22xf32>
    %110 = vector.shape_cast %109 : vector<22xf32> to vector<22x1xf32>
    %cst_47 = arith.constant 3.200000e+01 : f32
    %111 = vector.broadcast %cst_47 : f32 to vector<22x1xf32>
    %112 = arith.divf %110, %111 : vector<22x1xf32>
    %113 = vector.broadcast %112 : vector<22x1xf32> to vector<22x32xf32>
    %114 = arith.subf %104, %113 : vector<22x32xf32>
    %115 = arith.mulf %114, %114 : vector<22x32xf32>
    %cst_48 = arith.constant dense<0.000000e+00> : vector<22xf32>
    %116 = vector.multi_reduction <add>, %115, %cst_48 [1] : vector<22x32xf32> to vector<22xf32>
    %117 = vector.shape_cast %116 : vector<22xf32> to vector<22x1xf32>
    %cst_49 = arith.constant 3.200000e+01 : f32
    %118 = vector.broadcast %cst_49 : f32 to vector<22x1xf32>
    %119 = arith.divf %117, %118 : vector<22x1xf32>
    %cst_50 = arith.constant 9.99999974E-6 : f32
    %120 = vector.broadcast %cst_50 : f32 to vector<22x1xf32>
    %121 = arith.addf %119, %120 : vector<22x1xf32>
    %122 = math.rsqrt %121 : vector<22x1xf32>
    %123 = vector.broadcast %122 : vector<22x1xf32> to vector<22x32xf32>
    %124 = arith.mulf %114, %123 : vector<22x32xf32>
    %125 = vector.broadcast %106 : vector<1x32xf32> to vector<22x32xf32>
    %126 = arith.mulf %124, %125 : vector<22x32xf32>
    %127 = vector.broadcast %108 : vector<1x32xf32> to vector<22x32xf32>
    %128 = arith.addf %126, %127 : vector<22x32xf32>
    %129 = arith.truncf %128 : vector<22x32xf32> to vector<22x32xbf16>
    %c0_51 = arith.constant 0 : index
    %c0_52 = arith.constant 0 : index
    %c0_53 = arith.constant 0 : index
    %130 = vector.load %arg10[%c0_51, %c0_52, %c0_53] : memref<1x32x64xbf16, #tpu.memory_space<vmem>>, vector<1x32x64xbf16>
    %131 = vector.shape_cast %130 : vector<1x32x64xbf16> to vector<32x64xbf16>
    %cst_54 = arith.constant dense<0.000000e+00> : vector<22x64xf32>
    %132 = tpu.matmul %129, %131, %cst_54 {dimension_numbers = #tpu.dot_dimension_numbers<[1], [0], [0], [1], [0, 0, 1, 1], [], []>} : vector<22x32xbf16>, vector<32x64xbf16>, vector<22x64xf32> -> vector<22x64xf32>
    %c0_55 = arith.constant 0 : index
    %c0_56 = arith.constant 0 : index
    %c0_57 = arith.constant 0 : index
    %133 = vector.load %arg11[%c0_55, %c0_56, %c0_57] : memref<1x1x64xf32, #tpu.memory_space<vmem>>, vector<1x1x64xf32>
    %134 = vector.shape_cast %133 : vector<1x1x64xf32> to vector<1x64xf32>
    %135 = vector.broadcast %134 : vector<1x64xf32> to vector<22x64xf32>
    %136 = arith.addf %132, %135 : vector<22x64xf32>
    %137 = arith.mulf %136, %136 : vector<22x64xf32>
    %138 = arith.mulf %136, %137 : vector<22x64xf32>
    %cst_58 = arith.constant 4.471500e-02 : f32
    %139 = vector.broadcast %cst_58 : f32 to vector<22x64xf32>
    %140 = arith.mulf %139, %138 : vector<22x64xf32>
    %141 = arith.addf %136, %140 : vector<22x64xf32>
    %cst_59 = arith.constant 0.797884583 : f32
    %142 = vector.broadcast %cst_59 : f32 to vector<22x64xf32>
    %143 = arith.mulf %142, %141 : vector<22x64xf32>
    %144 = math.tanh %143 : vector<22x64xf32>
    %cst_60 = arith.constant 1.000000e+00 : f32
    %145 = vector.broadcast %cst_60 : f32 to vector<22x64xf32>
    %146 = arith.addf %145, %144 : vector<22x64xf32>
    %cst_61 = arith.constant 5.000000e-01 : f32
    %147 = vector.broadcast %cst_61 : f32 to vector<22x64xf32>
    %148 = arith.mulf %147, %146 : vector<22x64xf32>
    %149 = arith.mulf %136, %148 : vector<22x64xf32>
    %150 = arith.truncf %149 : vector<22x64xf32> to vector<22x64xbf16>
    %c0_62 = arith.constant 0 : index
    %c0_63 = arith.constant 0 : index
    %c0_64 = arith.constant 0 : index
    %151 = vector.load %arg12[%c0_62, %c0_63, %c0_64] : memref<1x64x32xbf16, #tpu.memory_space<vmem>>, vector<1x64x32xbf16>
    %152 = vector.shape_cast %151 : vector<1x64x32xbf16> to vector<64x32xbf16>
    %cst_65 = arith.constant dense<0.000000e+00> : vector<22x32xf32>
    %153 = tpu.matmul %150, %152, %cst_65 {dimension_numbers = #tpu.dot_dimension_numbers<[1], [0], [0], [1], [0, 0, 1, 1], [], []>} : vector<22x64xbf16>, vector<64x32xbf16>, vector<22x32xf32> -> vector<22x32xf32>
    %c0_66 = arith.constant 0 : index
    %c0_67 = arith.constant 0 : index
    %c0_68 = arith.constant 0 : index
    %154 = vector.load %arg13[%c0_66, %c0_67, %c0_68] : memref<1x1x32xf32, #tpu.memory_space<vmem>>, vector<1x1x32xf32>
    %155 = vector.shape_cast %154 : vector<1x1x32xf32> to vector<1x32xf32>
    %156 = vector.broadcast %155 : vector<1x32xf32> to vector<22x32xf32>
    %157 = arith.addf %153, %156 : vector<22x32xf32>
    %158 = arith.addf %128, %157 : vector<22x32xf32>
    %c0_69 = arith.constant 0 : index
    %c0_70 = arith.constant 0 : index
    %c0_71 = arith.constant 0 : index
    %159 = vector.load %arg14[%c0_69, %c0_70, %c0_71] : memref<1x1x32xf32, #tpu.memory_space<vmem>>, vector<1x1x32xf32>
    %160 = vector.shape_cast %159 : vector<1x1x32xf32> to vector<1x32xf32>
    %c0_72 = arith.constant 0 : index
    %c0_73 = arith.constant 0 : index
    %c0_74 = arith.constant 0 : index
    %161 = vector.load %arg15[%c0_72, %c0_73, %c0_74] : memref<1x1x32xf32, #tpu.memory_space<vmem>>, vector<1x1x32xf32>
    %162 = vector.shape_cast %161 : vector<1x1x32xf32> to vector<1x32xf32>
    %cst_75 = arith.constant dense<0.000000e+00> : vector<22xf32>
    %163 = vector.multi_reduction <add>, %158, %cst_75 [1] : vector<22x32xf32> to vector<22xf32>
    %164 = vector.shape_cast %163 : vector<22xf32> to vector<22x1xf32>
    %cst_76 = arith.constant 3.200000e+01 : f32
    %165 = vector.broadcast %cst_76 : f32 to vector<22x1xf32>
    %166 = arith.divf %164, %165 : vector<22x1xf32>
    %167 = vector.broadcast %166 : vector<22x1xf32> to vector<22x32xf32>
    %168 = arith.subf %158, %167 : vector<22x32xf32>
    %169 = arith.mulf %168, %168 : vector<22x32xf32>
    %cst_77 = arith.constant dense<0.000000e+00> : vector<22xf32>
    %170 = vector.multi_reduction <add>, %169, %cst_77 [1] : vector<22x32xf32> to vector<22xf32>
    %171 = vector.shape_cast %170 : vector<22xf32> to vector<22x1xf32>
    %cst_78 = arith.constant 3.200000e+01 : f32
    %172 = vector.broadcast %cst_78 : f32 to vector<22x1xf32>
    %173 = arith.divf %171, %172 : vector<22x1xf32>
    %cst_79 = arith.constant 9.99999974E-6 : f32
    %174 = vector.broadcast %cst_79 : f32 to vector<22x1xf32>
    %175 = arith.addf %173, %174 : vector<22x1xf32>
    %176 = math.rsqrt %175 : vector<22x1xf32>
    %177 = vector.broadcast %176 : vector<22x1xf32> to vector<22x32xf32>
    %178 = arith.mulf %168, %177 : vector<22x32xf32>
    %179 = vector.broadcast %160 : vector<1x32xf32> to vector<22x32xf32>
    %180 = arith.mulf %178, %179 : vector<22x32xf32>
    %181 = vector.broadcast %162 : vector<1x32xf32> to vector<22x32xf32>
    %182 = arith.addf %180, %181 : vector<22x32xf32>
    %c0_80 = arith.constant 0 : index
    %c0_81 = arith.constant 0 : index
    %183 = vector.load %arg16[%c0_80, %c0_81] : memref<22x32xf32, #tpu.memory_space<vmem>>, vector<22x32xf32>
    tpu.vector_store %arg16[%c0_80, %c0_81], %182 {strides = array<i32>} : memref<22x32xf32, #tpu.memory_space<vmem>>, vector<22x32xf32>,
    return
  }
  func.func @transform_0(%arg0: i32, %arg1: i32) -> (i32, i32) {
    %c0_i32 = arith.constant 0 : i32
    %c0_i32_0 = arith.constant 0 : i32
    return %arg0, %c0_i32 : i32, i32
  }
  func.func @transform_1(%arg0: i32, %arg1: i32) -> (i32, i32, i32) {
    %c0_i32 = arith.constant 0 : i32
    %c0_i32_0 = arith.constant 0 : i32
    %c0_i32_1 = arith.constant 0 : i32
    return %arg0, %c0_i32, %c0_i32_0 : i32, i32, i32
  }
  func.func @transform_2(%arg0: i32, %arg1: i32) -> (i32, i32, i32) {
    %c0_i32 = arith.constant 0 : i32
    %c0_i32_0 = arith.constant 0 : i32
    %c0_i32_1 = arith.constant 0 : i32
    return %arg1, %c0_i32, %c0_i32_0 : i32, i32, i32
  }
  func.func @transform_3(%arg0: i32, %arg1: i32) -> (i32, i32, i32) {
    %c0_i32 = arith.constant 0 : i32
    %c0_i32_0 = arith.constant 0 : i32
    %c0_i32_1 = arith.constant 0 : i32
    return %arg1, %c0_i32, %c0_i32_0 : i32, i32, i32
  }
  func.func @transform_4(%arg0: i32, %arg1: i32) -> (i32, i32, i32) {
    %c0_i32 = arith.constant 0 : i32
    %c0_i32_0 = arith.constant 0 : i32
    %c0_i32_1 = arith.constant 0 : i32
    return %arg1, %c0_i32, %c0_i32_0 : i32, i32, i32
  }
  func.func @transform_5(%arg0: i32, %arg1: i32) -> (i32, i32, i32) {
    %c0_i32 = arith.constant 0 : i32
    %c0_i32_0 = arith.constant 0 : i32
    %c0_i32_1 = arith.constant 0 : i32
    return %arg1, %c0_i32, %c0_i32_0 : i32, i32, i32
  }
  func.func @transform_6(%arg0: i32, %arg1: i32) -> (i32, i32, i32) {
    %c0_i32 = arith.constant 0 : i32
    %c0_i32_0 = arith.constant 0 : i32
    %c0_i32_1 = arith.constant 0 : i32
    return %arg1, %c0_i32, %c0_i32_0 : i32, i32, i32
  }
  func.func @transform_7(%arg0: i32, %arg1: i32) -> (i32, i32, i32) {
    %c0_i32 = arith.constant 0 : i32
    %c0_i32_0 = arith.constant 0 : i32
    %c0_i32_1 = arith.constant 0 : i32
    return %arg1, %c0_i32, %c0_i32_0 : i32, i32, i32
  }
  func.func @transform_8(%arg0: i32, %arg1: i32) -> (i32, i32, i32) {
    %c0_i32 = arith.constant 0 : i32
    %c0_i32_0 = arith.constant 0 : i32
    %c0_i32_1 = arith.constant 0 : i32
    return %arg1, %c0_i32, %c0_i32_0 : i32, i32, i32
  }
  func.func @transform_9(%arg0: i32, %arg1: i32) -> (i32, i32, i32) {
    %c0_i32 = arith.constant 0 : i32
    %c0_i32_0 = arith.constant 0 : i32
    %c0_i32_1 = arith.constant 0 : i32
    return %arg1, %c0_i32, %c0_i32_0 : i32, i32, i32
  }
  func.func @transform_10(%arg0: i32, %arg1: i32) -> (i32, i32, i32) {
    %c0_i32 = arith.constant 0 : i32
    %c0_i32_0 = arith.constant 0 : i32
    %c0_i32_1 = arith.constant 0 : i32
    return %arg1, %c0_i32, %c0_i32_0 : i32, i32, i32
  }
  func.func @transform_11(%arg0: i32, %arg1: i32) -> (i32, i32, i32) {
    %c0_i32 = arith.constant 0 : i32
    %c0_i32_0 = arith.constant 0 : i32
    %c0_i32_1 = arith.constant 0 : i32
    return %arg1, %c0_i32, %c0_i32_0 : i32, i32, i32
  }
  func.func @transform_12(%arg0: i32, %arg1: i32) -> (i32, i32, i32) {
    %c0_i32 = arith.constant 0 : i32
    %c0_i32_0 = arith.constant 0 : i32
    %c0_i32_1 = arith.constant 0 : i32
    return %arg1, %c0_i32, %c0_i32_0 : i32, i32, i32
  }
  func.func @transform_13(%arg0: i32, %arg1: i32) -> (i32, i32, i32) {
    %c0_i32 = arith.constant 0 : i32
    %c0_i32_0 = arith.constant 0 : i32
    %c0_i32_1 = arith.constant 0 : i32
    return %arg1, %c0_i32, %c0_i32_0 : i32, i32, i32
  }
  func.func @transform_14(%arg0: i32, %arg1: i32) -> (i32, i32) {
    %c0_i32 = arith.constant 0 : i32
    %c0_i32_0 = arith.constant 0 : i32
    return %arg0, %c0_i32 : i32, i32
  }
}

</mosaic_0001>

<llo_original>
// kernel: tpu_custom_call.1
$region0: #{tpu_custom_call.1}
  #allocation0 [shape = 'u32[]', space=smem, size = 0x4, offset = 0x4, fixed_abs, tag = 'smem constant byte address 0x4 - core index']
  #allocation1 [shape = 'u32[72,128]{1,0:T(1,128)}', space=vmem, size = 0x9000, scoped, tag = 'internal scratch']
  %s0 = inlined_call_operand.hbm [shape: f32[22,32], index: 0, kind: input, shape index: {}]
  %s1 = inlined_call_operand.hbm [shape: f32[2,1,11], index: 1, kind: input, shape index: {}]
  %s2 = inlined_call_operand.vmem [shape: bf16[2,32,96], index: 2, kind: input, shape index: {}]
  %s3 = inlined_call_operand.hbm [shape: f32[2,1,96], index: 3, kind: input, shape index: {}]
  %s4 = inlined_call_operand.vmem [shape: bf16[2,32,32], index: 4, kind: input, shape index: {}]
  %s5 = inlined_call_operand.vmem [shape: f32[2,1,32], index: 5, kind: input, shape index: {}]
  %s6 = inlined_call_operand.vmem [shape: f32[2,1,32], index: 6, kind: input, shape index: {}]
  %s7 = inlined_call_operand.hbm [shape: f32[2,1,32], index: 7, kind: input, shape index: {}]
  %s8 = inlined_call_operand.vmem [shape: bf16[2,32,64], index: 8, kind: input, shape index: {}]
  %s9 = inlined_call_operand.vmem [shape: f32[2,1,64], index: 9, kind: input, shape index: {}]
  %s10 = inlined_call_operand.vmem [shape: bf16[2,64,32], index: 10, kind: input, shape index: {}]
  %s11 = inlined_call_operand.vmem [shape: f32[2,1,32], index: 11, kind: input, shape index: {}]
  %s12 = inlined_call_operand.vmem [shape: f32[2,1,32], index: 12, kind: input, shape index: {}]
  %s13 = inlined_call_operand.hbm [shape: f32[2,1,32], index: 13, kind: input, shape index: {}]
  %s14 = inlined_call_operand.hbm [shape: f32[22,32], index: 14, kind: output, shape index: {}]
  %s15 = sld [smem:[#allocation0]]
  $region113: #{tpu_custom_call.1} parent=0
    _
  %s17 = ssub.s32 1, %s15
  %s18 = scalar_select 0, %s17, %s15
  $region1: #{tpu_custom_call.1} parent=0
    #allocation2 [shape = 'u8[12288]{0}', space=vmem, size = 0x3000, scoped, tag = 'input window, operand 0, single buffered']
    #allocation3 [shape = 's32[2]{0}', space=sflag, size = 0x8, scoped, tag = 'scoped memory for tpu_custom_call.1']
    #allocation4 [shape = 's32[2]{0}', space=sflag, size = 0x8, scoped, tag = 'scoped memory for tpu_custom_call.1']
    #allocation5 [shape = 'u8[1024]{0}', space=vmem, size = 0x400, scoped, tag = 'input window, operand 1, single buffered']
    #allocation6 [shape = 's32[1]{0}', space=sflag, size = 0x4, scoped, tag = 'scoped memory for tpu_custom_call.1']
    #allocation7 [shape = 'u8[1024]{0}', space=vmem, size = 0x400, scoped, tag = 'input window, operand 3']
    #allocation8 [shape = 'u8[1024]{0}', space=vmem, size = 0x400, scoped, tag = 'input window, operand 7']
    #allocation9 [shape = 'u8[1024]{0}', space=vmem, size = 0x400, scoped, tag = 'input window, operand 13']
    #allocation10 [shape = 'u8[12288]{0}', space=vmem, size = 0x3000, scoped, tag = 'output window, operand 0, single buffered']
    %19 = vsyncpa [#allocation3], 0
    %20 = vsyncpa [#allocation6], 0
    %21 = vsyncpa [#allocation4], 0
    loop: start=0, step=1, limit=4
    $region2: #{tpu_custom_call.1} parent=1 // loop_pre_header
      _
    $region3: #{tpu_custom_call.1} parent=1 // loop_header
      %s23 = sphi 0, %s27
      %p24 = scmp.ge.s32.totalorder %s23, 4
      %s30 = sphi 0, %s42
      %s31 = sphi 0, %s38
      %s32 = sphi 0, %s30
      %s33 = sphi 0, %s31
      %s34 = sphi 0, %s32
      %s35 = sphi 0, %s33
      %s45 = sphi 0, %s47
      %s48 = sphi 0, %s45
      %s49 = sphi 0, %s48
      %s65 = sphi 0, %s49
      %s71 = sphi 0, %s73
      %s74 = sphi 0, %s71
      %s75 = sphi 0, %s74
      %s91 = sphi 0, %s75
      %s97 = sphi 0, %s99
      %s100 = sphi 0, %s97
      %s101 = sphi 0, %s100
      %s117 = sphi 0, %s101
      %s123 = sphi 0, %s125
      %s126 = sphi 0, %s123
      %s127 = sphi 0, %s126
      %s143 = sphi 0, %s127
      %s149 = sphi 0, %s151
      %s152 = sphi 0, %s149
      %s153 = sphi 0, %s152
      %s169 = sphi 0, %s153
      %s175 = sphi 0, %s177
      %s178 = sphi 0, %s175
      %s179 = sphi 0, %s178
      %s195 = sphi 0, %s179
      %s201 = sphi 0, %s203
      %s204 = sphi 0, %s201
      %s205 = sphi 0, %s204
      %s221 = sphi 0, %s205
      %s227 = sphi 0, %s229
      %s230 = sphi 0, %s227
      %s231 = sphi 0, %s230
      %s247 = sphi 0, %s231
      %s253 = sphi 0, %s255
      %s256 = sphi 0, %s253
      %s257 = sphi 0, %s256
      %s273 = sphi 0, %s257
      %s279 = sphi 0, %s281
      %s282 = sphi 0, %s279
      %s283 = sphi 0, %s282
      %s299 = sphi 0, %s283
      %s305 = sphi 0, %s307
      %s308 = sphi 0, %s305
      %s309 = sphi 0, %s308
      %s325 = sphi 0, %s309
      %s331 = sphi 0, %s333
      %s334 = sphi 0, %s331
      %s335 = sphi 0, %s334
      %s351 = sphi 0, %s335
      %s357 = sphi 0, %s359
      %s360 = sphi 0, %s357
      %s361 = sphi 0, %s360
      %s377 = sphi 0, %s361
      %s383 = sphi 0, %s385
      %s386 = sphi 0, %s383
      %s387 = sphi 0, %s386
      %s403 = sphi 0, %s387
      %s409 = sphi 0, %s411
      %s412 = sphi 0, %s409
      %s413 = sphi 0, %s412
      %s429 = sphi 0, %s413
    $region4: #{tpu_custom_call.1} parent=1 // loop_header_branch
      %26 = sbr.rel (%p24) target = $region8
    $region5: #{tpu_custom_call.1} parent=1 // loop_body
      %s28 = ssub.s32 %s23, 1
      %s29 = ssub.s32 %s23, 2
      %s36 = sadd.s32 1, %s31
      %p37 = scmp.ge.s32.totalorder %s36, 2
      %s38 = scalar_select %p37, 0, %s36
      %s39 = sadd.s32 1, %s30
      %s40 = scalar_select %p37, %s39, %s30
      %p41 = scmp.ge.s32.totalorder %s40, 1
      %s42 = scalar_select %p41, 0, %s40
      %s43 = ssub.s32 %s30, %s42
      %p44 = scmp.eq.s32.totalorder %s43, 0
      %s46 = sadd.s32 %s45, 1
      %s47 = scalar_select %p44, %s45, %s46
      %p50 = pneg %p44
      %p51 = scmp.eq.s32.totalorder %s23, 1
      %p52 = por %p50, %p51
      %p53 = scmp.ne.s32.totalorder %s45, %s48
      %p54 = scmp.eq.s32.totalorder %s23, 0
      %p55 = por %p53, %p54
      %p56 = scmp.ne.s32.totalorder %s45, %s48
      %p57 = scmp.eq.s32.totalorder %s28, 1
      %p58 = por %p56, %p57
      %p59 = scmp.ne.s32.totalorder %s48, %s49
      %p60 = scmp.eq.s32.totalorder %s28, 0
      %p61 = por %p59, %p60
      %p62 = scmp.ne.s32.totalorder %s48, %s49
      %p63 = scmp.eq.s32.totalorder %s29, 1
      %p64 = por %p62, %p63
      %p66 = scmp.ne.s32.totalorder %s49, %s65
      %p67 = scmp.eq.s32.totalorder %s29, 0
      %p68 = por %p66, %p67
      %s69 = ssub.s32 %s30, %s42
      %p70 = scmp.eq.s32.totalorder %s69, 0
      %s72 = sadd.s32 %s71, 1
      %s73 = scalar_select %p70, %s71, %s72
      %p76 = pneg %p70
      %p77 = scmp.eq.s32.totalorder %s23, 1
      %p78 = por %p76, %p77
      %p79 = scmp.ne.s32.totalorder %s71, %s74
      %p80 = scmp.eq.s32.totalorder %s23, 0
      %p81 = por %p79, %p80
      %p82 = scmp.ne.s32.totalorder %s71, %s74
      %p83 = scmp.eq.s32.totalorder %s28, 1
      %p84 = por %p82, %p83
      %p85 = scmp.ne.s32.totalorder %s74, %s75
      %p86 = scmp.eq.s32.totalorder %s28, 0
      %p87 = por %p85, %p86
      %p88 = scmp.ne.s32.totalorder %s74, %s75
      %p89 = scmp.eq.s32.totalorder %s29, 1
      %p90 = por %p88, %p89
      %p92 = scmp.ne.s32.totalorder %s75, %s91
      %p93 = scmp.eq.s32.totalorder %s29, 0
      %p94 = por %p92, %p93
      %s95 = ssub.s32 %s31, %s38
      %p96 = scmp.eq.s32.totalorder %s95, 0
      %s98 = sadd.s32 %s97, 1
      %s99 = scalar_select %p96, %s97, %s98
      %p102 = pneg %p96
      %p103 = scmp.eq.s32.totalorder %s23, 1
      %p104 = por %p102, %p103
      %p105 = scmp.ne.s32.totalorder %s97, %s100
      %p106 = scmp.eq.s32.totalorder %s23, 0
      %p107 = por %p105, %p106
      %p108 = scmp.ne.s32.totalorder %s97, %s100
      %p109 = scmp.eq.s32.totalorder %s28, 1
      %p110 = por %p108, %p109
      %p111 = scmp.ne.s32.totalorder %s100, %s101
      %p112 = scmp.eq.s32.totalorder %s28, 0
      %p113 = por %p111, %p112
      %p114 = scmp.ne.s32.totalorder %s100, %s101
      %p115 = scmp.eq.s32.totalorder %s29, 1
      %p116 = por %p114, %p115
      %p118 = scmp.ne.s32.totalorder %s101, %s117
      %p119 = scmp.eq.s32.totalorder %s29, 0
      %p120 = por %p118, %p119
      %s121 = ssub.s32 %s31, %s38
      %p122 = scmp.eq.s32.totalorder %s121, 0
      %s124 = sadd.s32 %s123, 1
      %s125 = scalar_select %p122, %s123, %s124
      %p128 = pneg %p122
      %p129 = scmp.eq.s32.totalorder %s23, 1
      %p130 = por %p128, %p129
      %p131 = scmp.ne.s32.totalorder %s123, %s126
      %p132 = scmp.eq.s32.totalorder %s23, 0
      %p133 = por %p131, %p132
      %p134 = scmp.ne.s32.totalorder %s123, %s126
      %p135 = scmp.eq.s32.totalorder %s28, 1
      %p136 = por %p134, %p135
      %p137 = scmp.ne.s32.totalorder %s126, %s127
      %p138 = scmp.eq.s32.totalorder %s28, 0
      %p139 = por %p137, %p138
      %p140 = scmp.ne.s32.totalorder %s126, %s127
      %p141 = scmp.eq.s32.totalorder %s29, 1
      %p142 = por %p140, %p141
      %p144 = scmp.ne.s32.totalorder %s127, %s143
      %p145 = scmp.eq.s32.totalorder %s29, 0
      %p146 = por %p144, %p145
      %s147 = ssub.s32 %s31, %s38
      %p148 = scmp.eq.s32.totalorder %s147, 0
      %s150 = sadd.s32 %s149, 1
      %s151 = scalar_select %p148, %s149, %s150
      %p154 = pneg %p148
      %p155 = scmp.eq.s32.totalorder %s23, 1
      %p156 = por %p154, %p155
      %p157 = scmp.ne.s32.totalorder %s149, %s152
      %p158 = scmp.eq.s32.totalorder %s23, 0
      %p159 = por %p157, %p158
      %p160 = scmp.ne.s32.totalorder %s149, %s152
      %p161 = scmp.eq.s32.totalorder %s28, 1
      %p162 = por %p160, %p161
      %p163 = scmp.ne.s32.totalorder %s152, %s153
      %p164 = scmp.eq.s32.totalorder %s28, 0
      %p165 = por %p163, %p164
      %p166 = scmp.ne.s32.totalorder %s152, %s153
      %p167 = scmp.eq.s32.totalorder %s29, 1
      %p168 = por %p166, %p167
      %p170 = scmp.ne.s32.totalorder %s153, %s169
      %p171 = scmp.eq.s32.totalorder %s29, 0
      %p172 = por %p170, %p171
      %s173 = ssub.s32 %s31, %s38
      %p174 = scmp.eq.s32.totalorder %s173, 0
      %s176 = sadd.s32 %s175, 1
      %s177 = scalar_select %p174, %s175, %s176
      %p180 = pneg %p174
      %p181 = scmp.eq.s32.totalorder %s23, 1
      %p182 = por %p180, %p181
      %p183 = scmp.ne.s32.totalorder %s175, %s178
      %p184 = scmp.eq.s32.totalorder %s23, 0
      %p185 = por %p183, %p184
      %p186 = scmp.ne.s32.totalorder %s175, %s178
      %p187 = scmp.eq.s32.totalorder %s28, 1
      %p188 = por %p186, %p187
      %p189 = scmp.ne.s32.totalorder %s178, %s179
      %p190 = scmp.eq.s32.totalorder %s28, 0
      %p191 = por %p189, %p190
      %p192 = scmp.ne.s32.totalorder %s178, %s179
      %p193 = scmp.eq.s32.totalorder %s29, 1
      %p194 = por %p192, %p193
      %p196 = scmp.ne.s32.totalorder %s179, %s195
      %p197 = scmp.eq.s32.totalorder %s29, 0
      %p198 = por %p196, %p197
      %s199 = ssub.s32 %s31, %s38
      %p200 = scmp.eq.s32.totalorder %s199, 0
      %s202 = sadd.s32 %s201, 1
      %s203 = scalar_select %p200, %s201, %s202
      %p206 = pneg %p200
      %p207 = scmp.eq.s32.totalorder %s23, 1
      %p208 = por %p206, %p207
      %p209 = scmp.ne.s32.totalorder %s201, %s204
      %p210 = scmp.eq.s32.totalorder %s23, 0
      %p211 = por %p209, %p210
      %p212 = scmp.ne.s32.totalorder %s201, %s204
      %p213 = scmp.eq.s32.totalorder %s28, 1
      %p214 = por %p212, %p213
      %p215 = scmp.ne.s32.totalorder %s204, %s205
      %p216 = scmp.eq.s32.totalorder %s28, 0
      %p217 = por %p215, %p216
      %p218 = scmp.ne.s32.totalorder %s204, %s205
      %p219 = scmp.eq.s32.totalorder %s29, 1
      %p220 = por %p218, %p219
      %p222 = scmp.ne.s32.totalorder %s205, %s221
      %p223 = scmp.eq.s32.totalorder %s29, 0
      %p224 = por %p222, %p223
      %s225 = ssub.s32 %s31, %s38
      %p226 = scmp.eq.s32.totalorder %s225, 0
      %s228 = sadd.s32 %s227, 1
      %s229 = scalar_select %p226, %s227, %s228
      %p232 = pneg %p226
      %p233 = scmp.eq.s32.totalorder %s23, 1
      %p234 = por %p232, %p233
      %p235 = scmp.ne.s32.totalorder %s227, %s230
      %p236 = scmp.eq.s32.totalorder %s23, 0
      %p237 = por %p235, %p236
      %p238 = scmp.ne.s32.totalorder %s227, %s230
      %p239 = scmp.eq.s32.totalorder %s28, 1
      %p240 = por %p238, %p239
      %p241 = scmp.ne.s32.totalorder %s230, %s231
      %p242 = scmp.eq.s32.totalorder %s28, 0
      %p243 = por %p241, %p242
      %p244 = scmp.ne.s32.totalorder %s230, %s231
      %p245 = scmp.eq.s32.totalorder %s29, 1
      %p246 = por %p244, %p245
      %p248 = scmp.ne.s32.totalorder %s231, %s247
      %p249 = scmp.eq.s32.totalorder %s29, 0
      %p250 = por %p248, %p249
      %s251 = ssub.s32 %s31, %s38
      %p252 = scmp.eq.s32.totalorder %s251, 0
      %s254 = sadd.s32 %s253, 1
      %s255 = scalar_select %p252, %s253, %s254
      %p258 = pneg %p252
      %p259 = scmp.eq.s32.totalorder %s23, 1
      %p260 = por %p258, %p259
      %p261 = scmp.ne.s32.totalorder %s253, %s256
      %p262 = scmp.eq.s32.totalorder %s23, 0
      %p263 = por %p261, %p262
      %p264 = scmp.ne.s32.totalorder %s253, %s256
      %p265 = scmp.eq.s32.totalorder %s28, 1
      %p266 = por %p264, %p265
      %p267 = scmp.ne.s32.totalorder %s256, %s257
      %p268 = scmp.eq.s32.totalorder %s28, 0
      %p269 = por %p267, %p268
      %p270 = scmp.ne.s32.totalorder %s256, %s257
      %p271 = scmp.eq.s32.totalorder %s29, 1
      %p272 = por %p270, %p271
      %p274 = scmp.ne.s32.totalorder %s257, %s273
      %p275 = scmp.eq.s32.totalorder %s29, 0
      %p276 = por %p274, %p275
      %s277 = ssub.s32 %s31, %s38
      %p278 = scmp.eq.s32.totalorder %s277, 0
      %s280 = sadd.s32 %s279, 1
      %s281 = scalar_select %p278, %s279, %s280
      %p284 = pneg %p278
      %p285 = scmp.eq.s32.totalorder %s23, 1
      %p286 = por %p284, %p285
      %p287 = scmp.ne.s32.totalorder %s279, %s282
      %p288 = scmp.eq.s32.totalorder %s23, 0
      %p289 = por %p287, %p288
      %p290 = scmp.ne.s32.totalorder %s279, %s282
      %p291 = scmp.eq.s32.totalorder %s28, 1
      %p292 = por %p290, %p291
      %p293 = scmp.ne.s32.totalorder %s282, %s283
      %p294 = scmp.eq.s32.totalorder %s28, 0
      %p295 = por %p293, %p294
      %p296 = scmp.ne.s32.totalorder %s282, %s283
      %p297 = scmp.eq.s32.totalorder %s29, 1
      %p298 = por %p296, %p297
      %p300 = scmp.ne.s32.totalorder %s283, %s299
      %p301 = scmp.eq.s32.totalorder %s29, 0
      %p302 = por %p300, %p301
      %s303 = ssub.s32 %s31, %s38
      %p304 = scmp.eq.s32.totalorder %s303, 0
      %s306 = sadd.s32 %s305, 1
      %s307 = scalar_select %p304, %s305, %s306
      %p310 = pneg %p304
      %p311 = scmp.eq.s32.totalorder %s23, 1
      %p312 = por %p310, %p311
      %p313 = scmp.ne.s32.totalorder %s305, %s308
      %p314 = scmp.eq.s32.totalorder %s23, 0
      %p315 = por %p313, %p314
      %p316 = scmp.ne.s32.totalorder %s305, %s308
      %p317 = scmp.eq.s32.totalorder %s28, 1
      %p318 = por %p316, %p317
      %p319 = scmp.ne.s32.totalorder %s308, %s309
      %p320 = scmp.eq.s32.totalorder %s28, 0
      %p321 = por %p319, %p320
      %p322 = scmp.ne.s32.totalorder %s308, %s309
      %p323 = scmp.eq.s32.totalorder %s29, 1
      %p324 = por %p322, %p323
      %p326 = scmp.ne.s32.totalorder %s309, %s325
      %p327 = scmp.eq.s32.totalorder %s29, 0
      %p328 = por %p326, %p327
      %s329 = ssub.s32 %s31, %s38
      %p330 = scmp.eq.s32.totalorder %s329, 0
      %s332 = sadd.s32 %s331, 1
      %s333 = scalar_select %p330, %s331, %s332
      %p336 = pneg %p330
      %p337 = scmp.eq.s32.totalorder %s23, 1
      %p338 = por %p336, %p337
      %p339 = scmp.ne.s32.totalorder %s331, %s334
      %p340 = scmp.eq.s32.totalorder %s23, 0
      %p341 = por %p339, %p340
      %p342 = scmp.ne.s32.totalorder %s331, %s334
      %p343 = scmp.eq.s32.totalorder %s28, 1
      %p344 = por %p342, %p343
      %p345 = scmp.ne.s32.totalorder %s334, %s335
      %p346 = scmp.eq.s32.totalorder %s28, 0
      %p347 = por %p345, %p346
      %p348 = scmp.ne.s32.totalorder %s334, %s335
      %p349 = scmp.eq.s32.totalorder %s29, 1
      %p350 = por %p348, %p349
      %p352 = scmp.ne.s32.totalorder %s335, %s351
      %p353 = scmp.eq.s32.totalorder %s29, 0
      %p354 = por %p352, %p353
      %s355 = ssub.s32 %s31, %s38
      %p356 = scmp.eq.s32.totalorder %s355, 0
      %s358 = sadd.s32 %s357, 1
      %s359 = scalar_select %p356, %s357, %s358
      %p362 = pneg %p356
      %p363 = scmp.eq.s32.totalorder %s23, 1
      %p364 = por %p362, %p363
      %p365 = scmp.ne.s32.totalorder %s357, %s360
      %p366 = scmp.eq.s32.totalorder %s23, 0
      %p367 = por %p365, %p366
      %p368 = scmp.ne.s32.totalorder %s357, %s360
      %p369 = scmp.eq.s32.totalorder %s28, 1
      %p370 = por %p368, %p369
      %p371 = scmp.ne.s32.totalorder %s360, %s361
      %p372 = scmp.eq.s32.totalorder %s28, 0
      %p373 = por %p371, %p372
      %p374 = scmp.ne.s32.totalorder %s360, %s361
      %p375 = scmp.eq.s32.totalorder %s29, 1
      %p376 = por %p374, %p375
      %p378 = scmp.ne.s32.totalorder %s361, %s377
      %p379 = scmp.eq.s32.totalorder %s29, 0
      %p380 = por %p378, %p379
      %s381 = ssub.s32 %s31, %s38
      %p382 = scmp.eq.s32.totalorder %s381, 0
      %s384 = sadd.s32 %s383, 1
      %s385 = scalar_select %p382, %s383, %s384
      %p388 = pneg %p382
      %p389 = scmp.eq.s32.totalorder %s23, 1
      %p390 = por %p388, %p389
      %p391 = scmp.ne.s32.totalorder %s383, %s386
      %p392 = scmp.eq.s32.totalorder %s23, 0
      %p393 = por %p391, %p392
      %p394 = scmp.ne.s32.totalorder %s383, %s386
      %p395 = scmp.eq.s32.totalorder %s28, 1
      %p396 = por %p394, %p395
      %p397 = scmp.ne.s32.totalorder %s386, %s387
      %p398 = scmp.eq.s32.totalorder %s28, 0
      %p399 = por %p397, %p398
      %p400 = scmp.ne.s32.totalorder %s386, %s387
      %p401 = scmp.eq.s32.totalorder %s29, 1
      %p402 = por %p400, %p401
      %p404 = scmp.ne.s32.totalorder %s387, %s403
      %p405 = scmp.eq.s32.totalorder %s29, 0
      %p406 = por %p404, %p405
      %s407 = ssub.s32 %s30, %s42
      %p408 = scmp.eq.s32.totalorder %s407, 0
      %s410 = sadd.s32 %s409, 1
      %s411 = scalar_select %p408, %s409, %s410
      %p414 = pneg %p408
      %p415 = scmp.eq.s32.totalorder %s23, 1
      %p416 = por %p414, %p415
      %p417 = scmp.ne.s32.totalorder %s409, %s412
      %p418 = scmp.eq.s32.totalorder %s23, 0
      %p419 = por %p417, %p418
      %p420 = scmp.ne.s32.totalorder %s409, %s412
      %p421 = scmp.eq.s32.totalorder %s28, 1
      %p422 = por %p420, %p421
      %p423 = scmp.ne.s32.totalorder %s412, %s413
      %p424 = scmp.eq.s32.totalorder %s28, 0
      %p425 = por %p423, %p424
      %p426 = scmp.ne.s32.totalorder %s412, %s413
      %p427 = scmp.eq.s32.totalorder %s29, 1
      %p428 = por %p426, %p427
      %p430 = scmp.ne.s32.totalorder %s413, %s429
      %p431 = scmp.eq.s32.totalorder %s29, 0
      %p432 = por %p430, %p431
      %p433 = scmp.le.s32.totalorder 1, %s23
      %p434 = scmp.lt.s32.totalorder %s23, 3
      %p435 = pnand %p433, %p434
      %p436 = pneg %p435
      // Predicated region
      $region9: #{tpu_custom_call.1} parent=5 // pred_check
        _
      $region10: #{tpu_custom_call.1} parent=5 // pred_check_branch
        %438 = sbr.rel (%p435) target = $region12
      $region11: #{tpu_custom_call.1} parent=5 // pred_region
        %s439 = ssub.s32 %s23, 1
        // Predicated region
        $region13: #{tpu_custom_call.1} parent=11 // pred_check
          %p440 = pneg %p61
        $region14: #{tpu_custom_call.1} parent=11 // pred_check_branch
          %442 = sbr.rel (%p440) target = $region16
        $region15: #{tpu_custom_call.1} parent=11 // pred_region
          %s443 = smul.u32 3, %s32
          %445 = vsyncadd [#allocation3], 0
          %s446 = smul.addr %s443, 8
          %s447 = scalar_lea.hbm %s0, %s446
          %s448 = sshll.u32 %s447, 4
          %s449 = int_to_ptr.hbm [resolvable:$true] %s448
          %s450 = sshll.u32 [#allocation2], 4
          %s451 = int_to_ptr.vmem [resolvable:$true] %s450
          %456 = dma.hbm_to_vmem [thread:$0]  %s449, 384, %s451, [#allocation3], 128, 128, 8
        $region16: #{tpu_custom_call.1} parent=11 // pred_fallthru
          _
        // Predicated region
        $region17: #{tpu_custom_call.1} parent=11 // pred_check
          %p457 = pneg %p87
        $region18: #{tpu_custom_call.1} parent=11 // pred_check_branch
          %459 = sbr.rel (%p457) target = $region20
        $region19: #{tpu_custom_call.1} parent=11 // pred_region
          %s460 = smul.u32 2, %s32
          %462 = vsyncadd [#allocation6], 0
          %s463 = scalar_lea.hbm %s1, %s460
          %s464 = sshll.u32 %s463, 4
          %s465 = int_to_ptr.hbm [resolvable:$true] %s464
          %s466 = sshll.u32 [#allocation5], 4
          %s467 = int_to_ptr.vmem [resolvable:$true] %s466
          %472 = dma.hbm_to_vmem [thread:$0]  %s465, 32, %s467, [#allocation6], 16, 16, 1
        $region20: #{tpu_custom_call.1} parent=11 // pred_fallthru
          _
      $region12: #{tpu_custom_call.1} parent=5 // pred_fallthru
        _
      %p473 = scmp.lt.s32.totalorder %s23, 2
      // Predicated region
      $region21: #{tpu_custom_call.1} parent=5 // pred_check
        %p474 = pneg %p473
      $region22: #{tpu_custom_call.1} parent=5 // pred_check_branch
        %476 = sbr.rel (%p474) target = $region24
      $region23: #{tpu_custom_call.1} parent=5 // pred_region
        // Predicated region
        $region25: #{tpu_custom_call.1} parent=23 // pred_check
          %p477 = pneg %p107
        $region26: #{tpu_custom_call.1} parent=23 // pred_check_branch
          %479 = sbr.rel (%p477) target = $region28
        $region27: #{tpu_custom_call.1} parent=23 // pred_region
          %p480 = scmp.lt.s32.totalorder %s31, 1
          %s481 = scalar_select %p480, %s31, 1
          %s482 = smul.addr %s481, 4
          %s483 = smul.addr %s482, 4
          %s484 = scalar_lea.vmem %s2, %s483
        $region28: #{tpu_custom_call.1} parent=23 // pred_fallthru
          _
        // Predicated region
        $region29: #{tpu_custom_call.1} parent=23 // pred_check
          %p485 = pneg %p133
        $region30: #{tpu_custom_call.1} parent=23 // pred_check_branch
          %487 = sbr.rel (%p485) target = $region32
        $region31: #{tpu_custom_call.1} parent=23 // pred_region
          %s488 = sand.u32 %s23, 1
          %s489 = scalar_lea.sflag [#allocation3], %s488
          %s490 = sand.u32 %s123, 1
          %s491 = scalar_lea.vmem [#allocation7], %s490
          %493 = vsyncadd %s489, 0
          %s494 = scalar_lea.hbm %s3, %s31
          %s496 = sshll.u32 %s494, 4
          %s497 = int_to_ptr.hbm [resolvable:$true] %s496
          %s498 = sshll.u32 %s491, 4
          %s499 = int_to_ptr.vmem [resolvable:$true] %s498
          %501 = dma.hbm_to_vmem [thread:$0]  %s497, 16, %s499, %s489
        $region32: #{tpu_custom_call.1} parent=23 // pred_fallthru
          _
        // Predicated region
        $region33: #{tpu_custom_call.1} parent=23 // pred_check
          %p502 = pneg %p159
        $region34: #{tpu_custom_call.1} parent=23 // pred_check_branch
          %504 = sbr.rel (%p502) target = $region36
        $region35: #{tpu_custom_call.1} parent=23 // pred_region
          %p505 = scmp.lt.s32.totalorder %s31, 1
          %s506 = scalar_select %p505, %s31, 1
          %s507 = smul.addr %s506, 4
          %s508 = smul.addr %s507, 4
          %s509 = scalar_lea.vmem %s4, %s508
        $region36: #{tpu_custom_call.1} parent=23 // pred_fallthru
          _
        // Predicated region
        $region37: #{tpu_custom_call.1} parent=23 // pred_check
          %p510 = pneg %p185
        $region38: #{tpu_custom_call.1} parent=23 // pred_check_branch
          %512 = sbr.rel (%p510) target = $region40
        $region39: #{tpu_custom_call.1} parent=23 // pred_region
          %p513 = scmp.lt.s32.totalorder %s31, 1
          %s514 = scalar_select %p513, %s31, 1
          %s515 = scalar_lea.vmem %s5, %s514
        $region40: #{tpu_custom_call.1} parent=23 // pred_fallthru
          _
        // Predicated region
        $region41: #{tpu_custom_call.1} parent=23 // pred_check
          %p516 = pneg %p211
        $region42: #{tpu_custom_call.1} parent=23 // pred_check_branch
          %518 = sbr.rel (%p516) target = $region44
        $region43: #{tpu_custom_call.1} parent=23 // pred_region
          %p519 = scmp.lt.s32.totalorder %s31, 1
          %s520 = scalar_select %p519, %s31, 1
          %s521 = scalar_lea.vmem %s6, %s520
        $region44: #{tpu_custom_call.1} parent=23 // pred_fallthru
          _
        // Predicated region
        $region45: #{tpu_custom_call.1} parent=23 // pred_check
          %p522 = pneg %p237
        $region46: #{tpu_custom_call.1} parent=23 // pred_check_branch
          %524 = sbr.rel (%p522) target = $region48
        $region47: #{tpu_custom_call.1} parent=23 // pred_region
          %s525 = sand.u32 %s23, 1
          %s526 = scalar_lea.sflag [#allocation3], %s525
          %s527 = sand.u32 %s227, 1
          %s528 = scalar_lea.vmem [#allocation8], %s527
          %530 = vsyncadd %s526, 0
          %s531 = scalar_lea.hbm %s7, %s31
          %s533 = sshll.u32 %s531, 4
          %s534 = int_to_ptr.hbm [resolvable:$true] %s533
          %s535 = sshll.u32 %s528, 4
          %s536 = int_to_ptr.vmem [resolvable:$true] %s535
          %538 = dma.hbm_to_vmem [thread:$0]  %s534, 16, %s536, %s526
        $region48: #{tpu_custom_call.1} parent=23 // pred_fallthru
          _
        // Predicated region
        $region49: #{tpu_custom_call.1} parent=23 // pred_check
          %p539 = pneg %p263
        $region50: #{tpu_custom_call.1} parent=23 // pred_check_branch
          %541 = sbr.rel (%p539) target = $region52
        $region51: #{tpu_custom_call.1} parent=23 // pred_region
          %p542 = scmp.lt.s32.totalorder %s31, 1
          %s543 = scalar_select %p542, %s31, 1
          %s544 = smul.addr %s543, 4
          %s545 = smul.addr %s544, 4
          %s546 = scalar_lea.vmem %s8, %s545
        $region52: #{tpu_custom_call.1} parent=23 // pred_fallthru
          _
        // Predicated region
        $region53: #{tpu_custom_call.1} parent=23 // pred_check
          %p547 = pneg %p289
        $region54: #{tpu_custom_call.1} parent=23 // pred_check_branch
          %549 = sbr.rel (%p547) target = $region56
        $region55: #{tpu_custom_call.1} parent=23 // pred_region
          %p550 = scmp.lt.s32.totalorder %s31, 1
          %s551 = scalar_select %p550, %s31, 1
          %s552 = scalar_lea.vmem %s9, %s551
        $region56: #{tpu_custom_call.1} parent=23 // pred_fallthru
          _
        // Predicated region
        $region57: #{tpu_custom_call.1} parent=23 // pred_check
          %p553 = pneg %p315
        $region58: #{tpu_custom_call.1} parent=23 // pred_check_branch
          %555 = sbr.rel (%p553) target = $region60
        $region59: #{tpu_custom_call.1} parent=23 // pred_region
          %p556 = scmp.lt.s32.totalorder %s31, 1
          %s557 = scalar_select %p556, %s31, 1
          %s558 = smul.addr %s557, 8
          %s559 = smul.addr %s558, 4
          %s560 = scalar_lea.vmem %s10, %s559
        $region60: #{tpu_custom_call.1} parent=23 // pred_fallthru
          _
        // Predicated region
        $region61: #{tpu_custom_call.1} parent=23 // pred_check
          %p561 = pneg %p341
        $region62: #{tpu_custom_call.1} parent=23 // pred_check_branch
          %563 = sbr.rel (%p561) target = $region64
        $region63: #{tpu_custom_call.1} parent=23 // pred_region
          %p564 = scmp.lt.s32.totalorder %s31, 1
          %s565 = scalar_select %p564, %s31, 1
          %s566 = scalar_lea.vmem %s11, %s565
        $region64: #{tpu_custom_call.1} parent=23 // pred_fallthru
          _
        // Predicated region
        $region65: #{tpu_custom_call.1} parent=23 // pred_check
          %p567 = pneg %p367
        $region66: #{tpu_custom_call.1} parent=23 // pred_check_branch
          %569 = sbr.rel (%p567) target = $region68
        $region67: #{tpu_custom_call.1} parent=23 // pred_region
          %p570 = scmp.lt.s32.totalorder %s31, 1
          %s571 = scalar_select %p570, %s31, 1
          %s572 = scalar_lea.vmem %s12, %s571
        $region68: #{tpu_custom_call.1} parent=23 // pred_fallthru
          _
        // Predicated region
        $region69: #{tpu_custom_call.1} parent=23 // pred_check
          %p573 = pneg %p393
        $region70: #{tpu_custom_call.1} parent=23 // pred_check_branch
          %575 = sbr.rel (%p573) target = $region72
        $region71: #{tpu_custom_call.1} parent=23 // pred_region
          %s576 = sand.u32 %s23, 1
          %s577 = scalar_lea.sflag [#allocation3], %s576
          %s578 = sand.u32 %s383, 1
          %s579 = scalar_lea.vmem [#allocation9], %s578
          %581 = vsyncadd %s577, 0
          %s582 = scalar_lea.hbm %s13, %s31
          %s584 = sshll.u32 %s582, 4
          %s585 = int_to_ptr.hbm [resolvable:$true] %s584
          %s586 = sshll.u32 %s579, 4
          %s587 = int_to_ptr.vmem [resolvable:$true] %s586
          %589 = dma.hbm_to_vmem [thread:$0]  %s585, 16, %s587, %s577
        $region72: #{tpu_custom_call.1} parent=23 // pred_fallthru
          _
      $region24: #{tpu_custom_call.1} parent=5 // pred_fallthru
        _
      %p590 = scmp.le.s32.totalorder 1, %s23
      %p591 = scmp.lt.s32.totalorder %s23, 3
      %p592 = pnand %p590, %p591
      %p593 = pneg %p592
      // Predicated region
      $region73: #{tpu_custom_call.1} parent=5 // pred_check
        _
      $region74: #{tpu_custom_call.1} parent=5 // pred_check_branch
        %595 = sbr.rel (%p592) target = $region76
      $region75: #{tpu_custom_call.1} parent=5 // pred_region
        %s596 = ssub.s32 %s23, 1
        // Predicated region
        $region77: #{tpu_custom_call.1} parent=75 // pred_check
          %p597 = pneg %p61
        $region78: #{tpu_custom_call.1} parent=75 // pred_check_branch
          %599 = sbr.rel (%p597) target = $region80
        $region79: #{tpu_custom_call.1} parent=75 // pred_region
          %601 = dma.done [#allocation3], 384
        $region80: #{tpu_custom_call.1} parent=75 // pred_fallthru
          _
        // Predicated region
        $region81: #{tpu_custom_call.1} parent=75 // pred_check
          %p602 = pneg %p87
        $region82: #{tpu_custom_call.1} parent=75 // pred_check_branch
          %604 = sbr.rel (%p602) target = $region84
        $region83: #{tpu_custom_call.1} parent=75 // pred_region
          %606 = dma.done [#allocation6], 32
        $region84: #{tpu_custom_call.1} parent=75 // pred_fallthru
          _
        %s607 = sand.u32 %s28, 1
        %s608 = scalar_lea.sflag [#allocation3], %s607
        %s609 = sand.u32 %s126, 1
        %s610 = scalar_lea.vmem [#allocation7], %s609
        // Predicated region
        $region85: #{tpu_custom_call.1} parent=75 // pred_check
          %p611 = pneg %p139
        $region86: #{tpu_custom_call.1} parent=75 // pred_check_branch
          %613 = sbr.rel (%p611) target = $region88
        $region87: #{tpu_custom_call.1} parent=75 // pred_region
          %615 = dma.done %s608, 16
        $region88: #{tpu_custom_call.1} parent=75 // pred_fallthru
          _
        %s616 = sand.u32 %s28, 1
        %s617 = scalar_lea.sflag [#allocation3], %s616
        %s618 = sand.u32 %s230, 1
        %s619 = scalar_lea.vmem [#allocation8], %s618
        // Predicated region
        $region89: #{tpu_custom_call.1} parent=75 // pred_check
          %p620 = pneg %p243
        $region90: #{tpu_custom_call.1} parent=75 // pred_check_branch
          %622 = sbr.rel (%p620) target = $region92
        $region91: #{tpu_custom_call.1} parent=75 // pred_region
          %624 = dma.done %s617, 16
        $region92: #{tpu_custom_call.1} parent=75 // pred_fallthru
          _
        %s625 = sand.u32 %s28, 1
        %s626 = scalar_lea.sflag [#allocation3], %s625
        %s627 = sand.u32 %s386, 1
        %s628 = scalar_lea.vmem [#allocation9], %s627
        // Predicated region
        $region93: #{tpu_custom_call.1} parent=75 // pred_check
          %p629 = pneg %p399
        $region94: #{tpu_custom_call.1} parent=75 // pred_check_branch
          %631 = sbr.rel (%p629) target = $region96
        $region95: #{tpu_custom_call.1} parent=75 // pred_region
          %633 = dma.done %s626, 16
        $region96: #{tpu_custom_call.1} parent=75 // pred_fallthru
          _
        %p634 = pneg %p61
        %p635 = pneg %p58
        %p636 = pneg %p87
        %p637 = pneg %p84
        %p638 = scmp.lt.s32.totalorder %s33, 1
        %s639 = scalar_select %p638, %s33, 1
        %s640 = smul.addr %s639, 4
        %s641 = smul.addr %s640, 4
        %s642 = scalar_lea.vmem %s2, %s641
        %p643 = pneg %p113
        %p644 = pneg %p110
        %s645 = sand.u32 %s28, 1
        %s646 = scalar_lea.sflag [#allocation3], %s645
        %s647 = sand.u32 %s126, 1
        %s648 = scalar_lea.vmem [#allocation7], %s647
        %p649 = pneg %p139
        %p650 = pneg %p136
        %p651 = scmp.lt.s32.totalorder %s33, 1
        %s652 = scalar_select %p651, %s33, 1
        %s653 = smul.addr %s652, 4
        %s654 = smul.addr %s653, 4
        %s655 = scalar_lea.vmem %s4, %s654
        %p656 = pneg %p165
        %p657 = pneg %p162
        %p658 = scmp.lt.s32.totalorder %s33, 1
        %s659 = scalar_select %p658, %s33, 1
        %s660 = scalar_lea.vmem %s5, %s659
        %p661 = pneg %p191
        %p662 = pneg %p188
        %p663 = scmp.lt.s32.totalorder %s33, 1
        %s664 = scalar_select %p663, %s33, 1
        %s665 = scalar_lea.vmem %s6, %s664
        %p666 = pneg %p217
        %p667 = pneg %p214
        %s668 = sand.u32 %s28, 1
        %s669 = scalar_lea.sflag [#allocation3], %s668
        %s670 = sand.u32 %s230, 1
        %s671 = scalar_lea.vmem [#allocation8], %s670
        %p672 = pneg %p243
        %p673 = pneg %p240
        %p674 = scmp.lt.s32.totalorder %s33, 1
        %s675 = scalar_select %p674, %s33, 1
        %s676 = smul.addr %s675, 4
        %s677 = smul.addr %s676, 4
        %s678 = scalar_lea.vmem %s8, %s677
        %p679 = pneg %p269
        %p680 = pneg %p266
        %p681 = scmp.lt.s32.totalorder %s33, 1
        %s682 = scalar_select %p681, %s33, 1
        %s683 = scalar_lea.vmem %s9, %s682
        %p684 = pneg %p295
        %p685 = pneg %p292
        %p686 = scmp.lt.s32.totalorder %s33, 1
        %s687 = scalar_select %p686, %s33, 1
        %s688 = smul.addr %s687, 8
        %s689 = smul.addr %s688, 4
        %s690 = scalar_lea.vmem %s10, %s689
        %p691 = pneg %p321
        %p692 = pneg %p318
        %p693 = scmp.lt.s32.totalorder %s33, 1
        %s694 = scalar_select %p693, %s33, 1
        %s695 = scalar_lea.vmem %s11, %s694
        %p696 = pneg %p347
        %p697 = pneg %p344
        %p698 = scmp.lt.s32.totalorder %s33, 1
        %s699 = scalar_select %p698, %s33, 1
        %s700 = scalar_lea.vmem %s12, %s699
        %p701 = pneg %p373
        %p702 = pneg %p370
        %s703 = sand.u32 %s28, 1
        %s704 = scalar_lea.sflag [#allocation3], %s703
        %s705 = sand.u32 %s386, 1
        %s706 = scalar_lea.vmem [#allocation9], %s705
        %p707 = pneg %p399
        %p708 = pneg %p396
        %p709 = pneg %p425
        %p710 = pneg %p422
        %s711 = smul.u32 3, %s32
        %s712 = smul.u32 2, %s32
        %p713 = scmp.lt.s32.totalorder %s33, 1
        %s714 = scalar_select %p713, %s33, 1
        %s715 = smul.addr %s714, 4
        %s716 = smul.addr %s715, 4
        %s717 = scalar_lea.vmem %s2, %s716
        %p718 = scmp.lt.s32.totalorder %s33, 1
        %s719 = scalar_select %p718, %s33, 1
        %s720 = smul.addr %s719, 4
        %s721 = smul.addr %s720, 4
        %s722 = scalar_lea.vmem %s4, %s721
        %p723 = scmp.lt.s32.totalorder %s33, 1
        %s724 = scalar_select %p723, %s33, 1
        %s725 = scalar_lea.vmem %s5, %s724
        %p726 = scmp.lt.s32.totalorder %s33, 1
        %s727 = scalar_select %p726, %s33, 1
        %s728 = scalar_lea.vmem %s6, %s727
        %p729 = scmp.lt.s32.totalorder %s33, 1
        %s730 = scalar_select %p729, %s33, 1
        %s731 = smul.addr %s730, 4
        %s732 = smul.addr %s731, 4
        %s733 = scalar_lea.vmem %s8, %s732
        %p734 = scmp.lt.s32.totalorder %s33, 1
        %s735 = scalar_select %p734, %s33, 1
        %s736 = scalar_lea.vmem %s9, %s735
        %p737 = scmp.lt.s32.totalorder %s33, 1
        %s738 = scalar_select %p737, %s33, 1
        %s739 = smul.addr %s738, 8
        %s740 = smul.addr %s739, 4
        %s741 = scalar_lea.vmem %s10, %s740
        %p742 = scmp.lt.s32.totalorder %s33, 1
        %s743 = scalar_select %p742, %s33, 1
        %s744 = scalar_lea.vmem %s11, %s743
        %p745 = scmp.lt.s32.totalorder %s33, 1
        %s746 = scalar_select %p745, %s33, 1
        %s747 = scalar_lea.vmem %s12, %s746
        %s748 = smul.u32 3, %s32
        %p750 = scmp.eq.s32.totalorder %s33, 0
        // Predicated region
        $region97: #{tpu_custom_call.1} parent=75 // pred_check
          %p751 = pneg %p750
        $region98: #{tpu_custom_call.1} parent=75 // pred_check_branch
          %753 = sbr.rel (%p751) target = $region100
        $region99: #{tpu_custom_call.1} parent=75 // pred_region
          %v754 = vld [vmem:[#allocation2] sm:$0xff]
          %v755 = vld [vmem:[#allocation2 + $0x8] sm:$0xff]
          %v756 = vld [vmem:[#allocation2 + $0x10] sm:$0x3f]
          %vm757 = vcmask 261120
          %758 = vst.msk [vmem:[#allocation10] sm:$0xff] %vm757, %v754
          %759 = vst.msk [vmem:[#allocation10 + $0x8] sm:$0xff] %vm757, %v755
          %vm760 = vcmask 259072
          %761 = vst.msk [vmem:[#allocation10 + $0x10] sm:$0x3f] %vm760, %v756
        $region100: #{tpu_custom_call.1} parent=75 // pred_fallthru
          _
        %v762 = vld [vmem:[#allocation10] sm:$0xff]
        %v763 = vld [vmem:[#allocation10 + $0x8] sm:$0xff]
        %v764 = vld [vmem:[#allocation10 + $0x10] sm:$0x3f]
        %v765 = vpack.c.bf16 %v763, %v762
        %v766 = vpack.c.bf16 %v764, %v764
        %v767 = vld [vmem:[%s717] sm:$0xf]
        %v768 = vld [vmem:[%s717 + $0x4] sm:$0xf]
        %v769 = vld [vmem:[%s717 + $0x8] sm:$0xf]
        %v770 = vld [vmem:[%s717 + $0xc] sm:$0xf]
        %v771 = vld [vmem:[%s610] sm:$0x1]
        %v773 = vperm.slane %v771, 0
        %v779 = vunpack.c.l.b16 %v767
        %v780 = vunpack.c.l.b16 %v768
        %v781 = vunpack.c.l.b16 %v769
        %v782 = vunpack.c.l.b16 %v770
        %v783 = vpack.c.b16 %v780, %v779
        %v784 = vpack.c.b16 %v782, %v781
        %vm787 = vcmask 261120
        %v789 = vsel %vm787, %v765, 0
        %v792 = vsel %vm787, %v766, 0
        %794 = vmatpush.bf16.msra.mxu0 0
        %795 = vmatpush.bf16.msra.mxu0 0
        %796 = vmatpush.bf16.msra.mxu0 0
        %797 = vmatpush.bf16.msra.mxu0 0
        %798 = vmatpush.bf16.msra.mxu0 0
        %799 = vmatpush.bf16.msra.mxu0 0
        %800 = vmatpush.bf16.msra.mxu0 %v784
        %801 = vmatpush.bf16.msra.mxu0 %v783
        %802 = vmatmul.bf16.gmra.mxu0 %v789
        %v803 = vpop.f32.mrf.mxu0
        %v804 = vadd.f32 %v773, %v803
        %v805 = vpop.f32.mrf.mxu0
        %v806 = vadd.f32 %v773, %v805
        %807 = vmatmul.bf16.gmra.mxu0 %v792
        %v808 = vpop.f32.mrf.mxu0
        %v809 = vadd.f32 %v773, %v808
        %v810 = vpop.f32.mrf.mxu0
        %811 = vdwg.mxu0
        %v812 = vpack.c.bf16 %v804, %v804
        %v813 = vpack.c.bf16 %v806, %v806
        %v814 = vpack.c.bf16 %v809, %v809
        %v815 = vld [vmem:[#allocation5] sm:$0x1]
        %v818 = vunpack.c.l.b16 %v812
        %v819 = vunpack.c.l.b16 %v813
        %v820 = vpack.c.b16 %v819, %v818
        %821 = vrot.lane.b32.xlu0 %v820, 96
        %v822 = vpop.permute.xlu0 %821
        %vm823 = vcmask 64512
        %v825 = vsel %vm823, %v820, 0
        %v828 = vsel %vm823, %v822, 0
        %830 = vmatpush.bf16.xpose.msra.mxu0 0
        %831 = vmatpush.bf16.xpose.msra.mxu0 0
        %832 = vmatpush.bf16.xpose.msra.mxu0 0
        %833 = vmatpush.bf16.xpose.msra.mxu0 0
        %834 = vmatpush.bf16.xpose.msra.mxu0 0
        %835 = vmatpush.bf16.xpose.msra.mxu0 0
        %836 = vmatpush.bf16.xpose.msra.mxu0 0
        %837 = vmatpush.bf16.xpose.msra.mxu0 %v828
        %838 = vmatmul.bf16.gmra.mxu0 %v825
        %v839 = vpop.f32.mrf.mxu0
        %v840 = vadd.f32 0.0, %v839
        %v841 = vpop.f32.mrf.mxu0
        %v842 = vadd.f32 0.0, %v841
        %843 = vdwg.mxu0
        %844 = vrot.lane.b32.xlu0 %v820, 120
        %v845 = vpop.permute.xlu0 %844
        %846 = vrot.lane.b32.xlu0 %v820, 88
        %v847 = vpop.permute.xlu0 %846
        %v849 = vsel %vm823, %v845, 0
        %v852 = vsel %vm823, %v847, 0
        %854 = vmatpush.bf16.xpose.msra.mxu0 0
        %855 = vmatpush.bf16.xpose.msra.mxu0 0
        %856 = vmatpush.bf16.xpose.msra.mxu0 0
        %857 = vmatpush.bf16.xpose.msra.mxu0 0
        %858 = vmatpush.bf16.xpose.msra.mxu0 0
        %859 = vmatpush.bf16.xpose.msra.mxu0 0
        %860 = vmatpush.bf16.xpose.msra.mxu0 0
        %861 = vmatpush.bf16.xpose.msra.mxu0 %v852
        %862 = vmatmul.bf16.gmra.mxu0 %v849
        %v863 = vpop.f32.mrf.mxu0
        %v864 = vadd.f32 0.0, %v863
        %v865 = vpop.f32.mrf.mxu0
        %v866 = vadd.f32 0.0, %v865
        %867 = vdwg.mxu0
        %868 = vrot.lane.b32.xlu0 %v820, 112
        %v869 = vpop.permute.xlu0 %868
        %870 = vrot.lane.b32.xlu0 %v820, 80
        %v871 = vpop.permute.xlu0 %870
        %v873 = vsel %vm823, %v869, 0
        %v876 = vsel %vm823, %v871, 0
        %878 = vmatpush.bf16.xpose.msra.mxu0 0
        %879 = vmatpush.bf16.xpose.msra.mxu0 0
        %880 = vmatpush.bf16.xpose.msra.mxu0 0
        %881 = vmatpush.bf16.xpose.msra.mxu0 0
        %882 = vmatpush.bf16.xpose.msra.mxu0 0
        %883 = vmatpush.bf16.xpose.msra.mxu0 0
        %884 = vmatpush.bf16.xpose.msra.mxu0 0
        %885 = vmatpush.bf16.xpose.msra.mxu0 %v876
        %886 = vmatmul.bf16.gmra.mxu0 %v873
        %v887 = vpop.f32.mrf.mxu0
        %v888 = vadd.f32 0.0, %v887
        %v889 = vpop.f32.mrf.mxu0
        %v890 = vadd.f32 0.0, %v889
        %891 = vdwg.mxu0
        %892 = vrot.lane.b32.xlu0 %v820, 104
        %v893 = vpop.permute.xlu0 %892
        %894 = vrot.lane.b32.xlu0 %v820, 72
        %v895 = vpop.permute.xlu0 %894
        %v897 = vsel %vm823, %v893, 0
        %v900 = vsel %vm823, %v895, 0
        %902 = vmatpush.bf16.xpose.msra.mxu0 0
        %903 = vmatpush.bf16.xpose.msra.mxu0 0
        %904 = vmatpush.bf16.xpose.msra.mxu0 0
        %905 = vmatpush.bf16.xpose.msra.mxu0 0
        %906 = vmatpush.bf16.xpose.msra.mxu0 0
        %907 = vmatpush.bf16.xpose.msra.mxu0 0
        %908 = vmatpush.bf16.xpose.msra.mxu0 0
        %909 = vmatpush.bf16.xpose.msra.mxu0 %v900
        %910 = vmatmul.bf16.gmra.mxu0 %v897
        %v911 = vpop.f32.mrf.mxu0
        %v912 = vadd.f32 0.0, %v911
        %v913 = vpop.f32.mrf.mxu0
        %v914 = vadd.f32 0.0, %v913
        %915 = vdwg.mxu0
        %vm918 = vcmask 1042432
        %v919 = vrot.slane %v864, 5
        %v920 = vrot.slane %v866, 5
        %v921 = vsel %vm918, %v919, %v920
        %vm926 = vcmask 1045504
        %v927 = vrot.slane %v888, 2
        %v928 = vrot.slane %v890, 2
        %v929 = vsel %vm926, %v927, %v928
        %vm935 = vcmask 1040384
        %v936 = vrot.slane %v912, 7
        %v937 = vrot.slane %v914, 7
        %v938 = vsel %vm935, %v936, %v937
        %v941 = vsel %vm918, %v842, %v919
        %v942 = vsel %vm926, %v921, %v927
        %v943 = vsel %vm935, %v928, %v936
        %v945 = vperm.slane %v815, 0
        %v947 = vadd.f32 %v840, %v945
        %v948 = vadd.f32 %v941, %v945
        %v949 = vadd.f32 %v942, %v945
        %v950 = vadd.f32 %v929, %v945
        %v951 = vadd.f32 %v943, %v945
        %v952 = vadd.f32 %v938, %v945
        %vm953 = vcmask 89088
        %v954 = vsel %vm953, %v947, -inf
        %955 = vmax.xlane.f32.xlu0 %v954
        %v956 = vpop.xlane.xlu0 %955
        %v957 = vsel %vm953, %v948, -inf
        %958 = vmax.xlane.f32.xlu0 %v957
        %v959 = vpop.xlane.xlu0 %958
        %v960 = vsel %vm953, %v949, -inf
        %961 = vmax.xlane.f32.xlu0 %v960
        %v962 = vpop.xlane.xlu0 %961
        %v963 = vsel %vm953, %v950, -inf
        %964 = vmax.xlane.f32.xlu0 %v963
        %v965 = vpop.xlane.xlu0 %964
        %v966 = vsel %vm953, %v951, -inf
        %967 = vmax.xlane.f32.xlu0 %v966
        %v968 = vpop.xlane.xlu0 %967
        %vm969 = vcmask 84992
        %v970 = vsel %vm969, %v952, -inf
        %971 = vmax.xlane.f32.xlu0 %v970
        %v972 = vpop.xlane.xlu0 %971
        %v973 = vsub.f32 %v947, %v956
        %v974 = vsub.f32 %v948, %v959
        %v975 = vsub.f32 %v949, %v962
        %v976 = vsub.f32 %v950, %v965
        %v977 = vsub.f32 %v951, %v968
        %v978 = vsub.f32 %v952, %v972
        %v979 = vmul.f32 %v973, 1.442695
        %v980 = vpow.pop %v979
        %v981 = vmul.f32 %v974, 1.442695
        %v982 = vpow.pop %v981
        %v983 = vmul.f32 %v975, 1.442695
        %v984 = vpow.pop %v983
        %v985 = vmul.f32 %v976, 1.442695
        %v986 = vpow.pop %v985
        %v987 = vmul.f32 %v977, 1.442695
        %v988 = vpow.pop %v987
        %v989 = vmul.f32 %v978, 1.442695
        %v990 = vpow.pop %v989
        %v991 = vsel %vm953, %v980, 0.0
        %992 = vadd.xlane.f32.xlu0 %v991
        %v993 = vpop.xlane.xlu0 %992
        %v994 = vsel %vm953, %v982, 0.0
        %995 = vadd.xlane.f32.xlu0 %v994
        %v996 = vpop.xlane.xlu0 %995
        %v997 = vsel %vm953, %v984, 0.0
        %998 = vadd.xlane.f32.xlu0 %v997
        %v999 = vpop.xlane.xlu0 %998
        %v1000 = vsel %vm953, %v986, 0.0
        %1001 = vadd.xlane.f32.xlu0 %v1000
        %v1002 = vpop.xlane.xlu0 %1001
        %v1003 = vsel %vm953, %v988, 0.0
        %1004 = vadd.xlane.f32.xlu0 %v1003
        %v1005 = vpop.xlane.xlu0 %1004
        %v1006 = vsel %vm969, %v990, 0.0
        %1007 = vadd.xlane.f32.xlu0 %v1006
        %v1008 = vpop.xlane.xlu0 %1007
        %v1009 = vrcp.pop %v993
        %v1010 = vrcp.pop %v996
        %v1011 = vrcp.pop %v999
        %v1012 = vrcp.pop %v1002
        %v1013 = vrcp.pop %v1005
        %v1014 = vrcp.pop %v1008
        %v1015 = vmul.f32 %v980, %v1009
        %v1016 = vmul.f32 %v982, %v1010
        %v1017 = vmul.f32 %v984, %v1011
        %v1018 = vmul.f32 %v986, %v1012
        %v1019 = vmul.f32 %v988, %v1013
        %v1020 = vmul.f32 %v990, %v1014
        %v1021 = vpack.c.bf16 %v1015, %v1015
        %v1022 = vpack.c.bf16 %v1016, %v1016
        %v1023 = vpack.c.bf16 %v1017, %v1017
        %v1024 = vpack.c.bf16 %v1018, %v1018
        %v1025 = vpack.c.bf16 %v1019, %v1019
        %v1026 = vpack.c.bf16 %v1020, %v1020
        %v1029 = vunpack.c.l.b16 %v1021
        %v1030 = vunpack.c.l.b16 %v1022
        %v1031 = vpack.c.b16 %v1030, %v1029
        %1032 = vrot.lane.b32.xlu0 %v820, 64
        %v1033 = vpop.permute.xlu0 %1032
        %v1035 = vsel %vm953, %v1031, 0
        %vm1037 = vcmask 1044480
        %v1038 = vsel %vm1037, 4294967295, 65535
        %v1039 = vsel %vm926, %v1038, 0
        %v1041 = vand.u32 %v1033, %v1039
        %1043 = vmatpush.bf16.msra.mxu0 0
        %1044 = vmatpush.bf16.msra.mxu0 0
        %1045 = vmatpush.bf16.msra.mxu0 0
        %1046 = vmatpush.bf16.msra.mxu0 0
        %1047 = vmatpush.bf16.msra.mxu0 0
        %1048 = vmatpush.bf16.msra.mxu0 0
        %1049 = vmatpush.bf16.msra.mxu0 0
        %1050 = vmatpush.bf16.msra.mxu0 %v1041
        %1051 = vmatmul.bf16.gmra.mxu0 %v1035
        %v1052 = vpop.f32.mrf.mxu0
        %v1053 = vadd.f32 0.0, %v1052
        %v1054 = vpop.f32.mrf.mxu0
        %v1055 = vadd.f32 0.0, %v1054
        %1056 = vdwg.mxu0
        %v1058 = vunpack.c.l.b16 %v1023
        %v1059 = vpack.c.b16 %v1058, %v1030
        %v1061 = vshrl.u32 %v1059, 16
        %v1063 = vrot.slane %v1061, 1
        %v1064 = vshll.u32 %v1059, 16
        %v1066 = vrot.slane %v1064, 2
        %v1067 = vor.u32 %v1063, %v1066
        %1068 = vrot.lane.b32.xlu0 %v820, 56
        %v1069 = vpop.permute.xlu0 %1068
        %v1071 = vsel %vm953, %v1067, 0
        %v1074 = vand.u32 %v1069, %v1039
        %1076 = vmatpush.bf16.msra.mxu0 0
        %1077 = vmatpush.bf16.msra.mxu0 0
        %1078 = vmatpush.bf16.msra.mxu0 0
        %1079 = vmatpush.bf16.msra.mxu0 0
        %1080 = vmatpush.bf16.msra.mxu0 0
        %1081 = vmatpush.bf16.msra.mxu0 0
        %1082 = vmatpush.bf16.msra.mxu0 0
        %1083 = vmatpush.bf16.msra.mxu0 %v1074
        %1084 = vmatmul.bf16.gmra.mxu0 %v1071
        %v1085 = vpop.f32.mrf.mxu0
        %v1086 = vadd.f32 0.0, %v1085
        %v1087 = vpop.f32.mrf.mxu0
        %v1088 = vadd.f32 0.0, %v1087
        %1089 = vdwg.mxu0
        %v1092 = vunpack.c.l.b16 %v1024
        %v1093 = vunpack.c.l.b16 %v1025
        %v1094 = vpack.c.b16 %v1092, %v1058
        %v1095 = vpack.c.b16 %v1093, %v1093
        %vm1096 = vcmask 1044480
        %v1097 = vrot.slane %v1094, 3
        %v1098 = vrot.slane %v1095, 3
        %v1099 = vsel %vm1096, %v1097, %v1098
        %1100 = vrot.lane.b32.xlu0 %v820, 48
        %v1101 = vpop.permute.xlu0 %1100
        %v1103 = vsel %vm953, %v1099, 0
        %v1106 = vand.u32 %v1101, %v1039
        %1108 = vmatpush.bf16.msra.mxu0 0
        %1109 = vmatpush.bf16.msra.mxu0 0
        %1110 = vmatpush.bf16.msra.mxu0 0
        %1111 = vmatpush.bf16.msra.mxu0 0
        %1112 = vmatpush.bf16.msra.mxu0 0
        %1113 = vmatpush.bf16.msra.mxu0 0
        %1114 = vmatpush.bf16.msra.mxu0 0
        %1115 = vmatpush.bf16.msra.mxu0 %v1106
        %1116 = vmatmul.bf16.gmra.mxu0 %v1103
        %v1117 = vpop.f32.mrf.mxu0
        %v1118 = vadd.f32 0.0, %v1117
        %v1119 = vpop.f32.mrf.mxu0
        %v1120 = vadd.f32 0.0, %v1119
        %1121 = vdwg.mxu0
        %v1123 = vunpack.c.l.b16 %v1026
        %v1124 = vpack.c.b16 %v1123, %v1093
        %v1126 = vshrl.u32 %v1124, 16
        %v1128 = vshll.u32 %v1124, 16
        %v1130 = vrot.slane %v1128, 1
        %v1131 = vor.u32 %v1126, %v1130
        %1132 = vrot.lane.b32.xlu0 %v820, 40
        %v1133 = vpop.permute.xlu0 %1132
        %v1135 = vsel %vm953, %v1131, 0
        %v1138 = vand.u32 %v1133, %v1039
        %1140 = vmatpush.bf16.msra.mxu0 0
        %1141 = vmatpush.bf16.msra.mxu0 0
        %1142 = vmatpush.bf16.msra.mxu0 0
        %1143 = vmatpush.bf16.msra.mxu0 0
        %1144 = vmatpush.bf16.msra.mxu0 0
        %1145 = vmatpush.bf16.msra.mxu0 0
        %1146 = vmatpush.bf16.msra.mxu0 0
        %1147 = vmatpush.bf16.msra.mxu0 %v1138
        %1148 = vmatmul.bf16.gmra.mxu0 %v1135
        %v1149 = vpop.f32.mrf.mxu0
        %v1150 = vadd.f32 0.0, %v1149
        %v1151 = vpop.f32.mrf.mxu0
        %v1152 = vadd.f32 0.0, %v1151
        %1153 = vdwg.mxu0
        %1156 = vrot.lane.b32.xlu0 %v1086, 8
        %v1157 = vpop.permute.xlu0 %1156
        %1158 = vrot.lane.b32.xlu0 %v1088, 8
        %v1159 = vpop.permute.xlu0 %1158
        %1164 = vrot.lane.b32.xlu0 %v1118, 16
        %v1165 = vpop.permute.xlu0 %1164
        %1166 = vrot.lane.b32.xlu0 %v1120, 16
        %v1167 = vpop.permute.xlu0 %1166
        %1172 = vrot.lane.b32.xlu0 %v1150, 24
        %v1173 = vpop.permute.xlu0 %1172
        %1174 = vrot.lane.b32.xlu0 %v1152, 24
        %v1175 = vpop.permute.xlu0 %1174
        %v1178 = vsel %vm823, %v1053, %v1157
        %v1179 = vsel %vm823, %v1055, %v1159
        %vm1180 = vcmask 130048
        %v1181 = vsel %vm1180, %v1178, %v1165
        %v1182 = vsel %vm1180, %v1179, %v1167
        %vm1183 = vcmask 195584
        %v1184 = vsel %vm1183, %v1181, %v1173
        %v1185 = vsel %vm1183, %v1182, %v1175
        %s1186 = scalar_lea.vmem [#allocation5], 1
        %v1187 = vld [vmem:[%s1186] sm:$0x1]
        %v1189 = vunpack.c.l.b16 %v814
        %v1190 = vpack.c.b16 %v1189, %v819
        %v1192 = vshrl.u32 %v1190, 16
        %v1194 = vrot.slane %v1192, 1
        %v1195 = vshll.u32 %v1190, 16
        %v1197 = vrot.slane %v1195, 2
        %v1198 = vor.u32 %v1194, %v1197
        %1199 = vrot.lane.b32.xlu0 %v1198, 96
        %v1200 = vpop.permute.xlu0 %1199
        %v1202 = vsel %vm823, %v1198, 0
        %v1205 = vsel %vm823, %v1200, 0
        %1207 = vmatpush.bf16.xpose.msra.mxu0 0
        %1208 = vmatpush.bf16.xpose.msra.mxu0 0
        %1209 = vmatpush.bf16.xpose.msra.mxu0 0
        %1210 = vmatpush.bf16.xpose.msra.mxu0 0
        %1211 = vmatpush.bf16.xpose.msra.mxu0 0
        %1212 = vmatpush.bf16.xpose.msra.mxu0 0
        %1213 = vmatpush.bf16.xpose.msra.mxu0 0
        %1214 = vmatpush.bf16.xpose.msra.mxu0 %v1205
        %1215 = vmatmul.bf16.gmra.mxu0 %v1202
        %v1216 = vpop.f32.mrf.mxu0
        %v1217 = vadd.f32 0.0, %v1216
        %v1218 = vpop.f32.mrf.mxu0
        %v1219 = vadd.f32 0.0, %v1218
        %1220 = vdwg.mxu0
        %1221 = vrot.lane.b32.xlu0 %v1198, 120
        %v1222 = vpop.permute.xlu0 %1221
        %1223 = vrot.lane.b32.xlu0 %v1198, 88
        %v1224 = vpop.permute.xlu0 %1223
        %v1226 = vsel %vm823, %v1222, 0
        %v1229 = vsel %vm823, %v1224, 0
        %1231 = vmatpush.bf16.xpose.msra.mxu0 0
        %1232 = vmatpush.bf16.xpose.msra.mxu0 0
        %1233 = vmatpush.bf16.xpose.msra.mxu0 0
        %1234 = vmatpush.bf16.xpose.msra.mxu0 0
        %1235 = vmatpush.bf16.xpose.msra.mxu0 0
        %1236 = vmatpush.bf16.xpose.msra.mxu0 0
        %1237 = vmatpush.bf16.xpose.msra.mxu0 0
        %1238 = vmatpush.bf16.xpose.msra.mxu0 %v1229
        %1239 = vmatmul.bf16.gmra.mxu0 %v1226
        %v1240 = vpop.f32.mrf.mxu0
        %v1241 = vadd.f32 0.0, %v1240
        %v1242 = vpop.f32.mrf.mxu0
        %v1243 = vadd.f32 0.0, %v1242
        %1244 = vdwg.mxu0
        %1245 = vrot.lane.b32.xlu0 %v1198, 112
        %v1246 = vpop.permute.xlu0 %1245
        %1247 = vrot.lane.b32.xlu0 %v1198, 80
        %v1248 = vpop.permute.xlu0 %1247
        %v1250 = vsel %vm823, %v1246, 0
        %v1253 = vsel %vm823, %v1248, 0
        %1255 = vmatpush.bf16.xpose.msra.mxu0 0
        %1256 = vmatpush.bf16.xpose.msra.mxu0 0
        %1257 = vmatpush.bf16.xpose.msra.mxu0 0
        %1258 = vmatpush.bf16.xpose.msra.mxu0 0
        %1259 = vmatpush.bf16.xpose.msra.mxu0 0
        %1260 = vmatpush.bf16.xpose.msra.mxu0 0
        %1261 = vmatpush.bf16.xpose.msra.mxu0 0
        %1262 = vmatpush.bf16.xpose.msra.mxu0 %v1253
        %1263 = vmatmul.bf16.gmra.mxu0 %v1250
        %v1264 = vpop.f32.mrf.mxu0
        %v1265 = vadd.f32 0.0, %v1264
        %v1266 = vpop.f32.mrf.mxu0
        %v1267 = vadd.f32 0.0, %v1266
        %1268 = vdwg.mxu0
        %1269 = vrot.lane.b32.xlu0 %v1198, 104
        %v1270 = vpop.permute.xlu0 %1269
        %1271 = vrot.lane.b32.xlu0 %v1198, 72
        %v1272 = vpop.permute.xlu0 %1271
        %v1274 = vsel %vm823, %v1270, 0
        %v1277 = vsel %vm823, %v1272, 0
        %1279 = vmatpush.bf16.xpose.msra.mxu0 0
        %1280 = vmatpush.bf16.xpose.msra.mxu0 0
        %1281 = vmatpush.bf16.xpose.msra.mxu0 0
        %1282 = vmatpush.bf16.xpose.msra.mxu0 0
        %1283 = vmatpush.bf16.xpose.msra.mxu0 0
        %1284 = vmatpush.bf16.xpose.msra.mxu0 0
        %1285 = vmatpush.bf16.xpose.msra.mxu0 0
        %1286 = vmatpush.bf16.xpose.msra.mxu0 %v1277
        %1287 = vmatmul.bf16.gmra.mxu0 %v1274
        %v1288 = vpop.f32.mrf.mxu0
        %v1289 = vadd.f32 0.0, %v1288
        %v1290 = vpop.f32.mrf.mxu0
        %v1291 = vadd.f32 0.0, %v1290
        %1292 = vdwg.mxu0
        %v1295 = vrot.slane %v1241, 5
        %v1296 = vrot.slane %v1243, 5
        %v1297 = vsel %vm918, %v1295, %v1296
        %v1302 = vrot.slane %v1265, 2
        %v1303 = vrot.slane %v1267, 2
        %v1304 = vsel %vm926, %v1302, %v1303
        %v1310 = vrot.slane %v1289, 7
        %v1311 = vrot.slane %v1291, 7
        %v1312 = vsel %vm935, %v1310, %v1311
        %v1315 = vsel %vm918, %v1219, %v1295
        %v1316 = vsel %vm926, %v1297, %v1302
        %v1317 = vsel %vm935, %v1303, %v1310
        %v1319 = vperm.slane %v1187, 0
        %v1321 = vadd.f32 %v1217, %v1319
        %v1322 = vadd.f32 %v1315, %v1319
        %v1323 = vadd.f32 %v1316, %v1319
        %v1324 = vadd.f32 %v1304, %v1319
        %v1325 = vadd.f32 %v1317, %v1319
        %v1326 = vadd.f32 %v1312, %v1319
        %v1327 = vsel %vm953, %v1321, -inf
        %1328 = vmax.xlane.f32.xlu0 %v1327
        %v1329 = vpop.xlane.xlu0 %1328
        %v1330 = vsel %vm953, %v1322, -inf
        %1331 = vmax.xlane.f32.xlu0 %v1330
        %v1332 = vpop.xlane.xlu0 %1331
        %v1333 = vsel %vm953, %v1323, -inf
        %1334 = vmax.xlane.f32.xlu0 %v1333
        %v1335 = vpop.xlane.xlu0 %1334
        %v1336 = vsel %vm953, %v1324, -inf
        %1337 = vmax.xlane.f32.xlu0 %v1336
        %v1338 = vpop.xlane.xlu0 %1337
        %v1339 = vsel %vm953, %v1325, -inf
        %1340 = vmax.xlane.f32.xlu0 %v1339
        %v1341 = vpop.xlane.xlu0 %1340
        %v1342 = vsel %vm969, %v1326, -inf
        %1343 = vmax.xlane.f32.xlu0 %v1342
        %v1344 = vpop.xlane.xlu0 %1343
        %v1345 = vsub.f32 %v1321, %v1329
        %v1346 = vsub.f32 %v1322, %v1332
        %v1347 = vsub.f32 %v1323, %v1335
        %v1348 = vsub.f32 %v1324, %v1338
        %v1349 = vsub.f32 %v1325, %v1341
        %v1350 = vsub.f32 %v1326, %v1344
        %v1351 = vmul.f32 %v1345, 1.442695
        %v1352 = vpow.pop %v1351
        %v1353 = vmul.f32 %v1346, 1.442695
        %v1354 = vpow.pop %v1353
        %v1355 = vmul.f32 %v1347, 1.442695
        %v1356 = vpow.pop %v1355
        %v1357 = vmul.f32 %v1348, 1.442695
        %v1358 = vpow.pop %v1357
        %v1359 = vmul.f32 %v1349, 1.442695
        %v1360 = vpow.pop %v1359
        %v1361 = vmul.f32 %v1350, 1.442695
        %v1362 = vpow.pop %v1361
        %v1363 = vsel %vm953, %v1352, 0.0
        %1364 = vadd.xlane.f32.xlu0 %v1363
        %v1365 = vpop.xlane.xlu0 %1364
        %v1366 = vsel %vm953, %v1354, 0.0
        %1367 = vadd.xlane.f32.xlu0 %v1366
        %v1368 = vpop.xlane.xlu0 %1367
        %v1369 = vsel %vm953, %v1356, 0.0
        %1370 = vadd.xlane.f32.xlu0 %v1369
        %v1371 = vpop.xlane.xlu0 %1370
        %v1372 = vsel %vm953, %v1358, 0.0
        %1373 = vadd.xlane.f32.xlu0 %v1372
        %v1374 = vpop.xlane.xlu0 %1373
        %v1375 = vsel %vm953, %v1360, 0.0
        %1376 = vadd.xlane.f32.xlu0 %v1375
        %v1377 = vpop.xlane.xlu0 %1376
        %v1378 = vsel %vm969, %v1362, 0.0
        %1379 = vadd.xlane.f32.xlu0 %v1378
        %v1380 = vpop.xlane.xlu0 %1379
        %v1381 = vrcp.pop %v1365
        %v1382 = vrcp.pop %v1368
        %v1383 = vrcp.pop %v1371
        %v1384 = vrcp.pop %v1374
        %v1385 = vrcp.pop %v1377
        %v1386 = vrcp.pop %v1380
        %v1387 = vmul.f32 %v1352, %v1381
        %v1388 = vmul.f32 %v1354, %v1382
        %v1389 = vmul.f32 %v1356, %v1383
        %v1390 = vmul.f32 %v1358, %v1384
        %v1391 = vmul.f32 %v1360, %v1385
        %v1392 = vmul.f32 %v1362, %v1386
        %v1393 = vpack.c.bf16 %v1387, %v1387
        %v1394 = vpack.c.bf16 %v1388, %v1388
        %v1395 = vpack.c.bf16 %v1389, %v1389
        %v1396 = vpack.c.bf16 %v1390, %v1390
        %v1397 = vpack.c.bf16 %v1391, %v1391
        %v1398 = vpack.c.bf16 %v1392, %v1392
        %v1401 = vunpack.c.l.b16 %v1393
        %v1402 = vunpack.c.l.b16 %v1394
        %v1403 = vpack.c.b16 %v1402, %v1401
        %1404 = vrot.lane.b32.xlu0 %v1198, 64
        %v1405 = vpop.permute.xlu0 %1404
        %v1407 = vsel %vm953, %v1403, 0
        %v1410 = vand.u32 %v1405, %v1039
        %1412 = vmatpush.bf16.msra.mxu0 0
        %1413 = vmatpush.bf16.msra.mxu0 0
        %1414 = vmatpush.bf16.msra.mxu0 0
        %1415 = vmatpush.bf16.msra.mxu0 0
        %1416 = vmatpush.bf16.msra.mxu0 0
        %1417 = vmatpush.bf16.msra.mxu0 0
        %1418 = vmatpush.bf16.msra.mxu0 0
        %1419 = vmatpush.bf16.msra.mxu0 %v1410
        %1420 = vmatmul.bf16.gmra.mxu0 %v1407
        %v1421 = vpop.f32.mrf.mxu0
        %v1422 = vadd.f32 0.0, %v1421
        %v1423 = vpop.f32.mrf.mxu0
        %v1424 = vadd.f32 0.0, %v1423
        %1425 = vdwg.mxu0
        %v1427 = vunpack.c.l.b16 %v1395
        %v1428 = vpack.c.b16 %v1427, %v1402
        %v1430 = vshrl.u32 %v1428, 16
        %v1432 = vrot.slane %v1430, 1
        %v1433 = vshll.u32 %v1428, 16
        %v1435 = vrot.slane %v1433, 2
        %v1436 = vor.u32 %v1432, %v1435
        %1437 = vrot.lane.b32.xlu0 %v1198, 56
        %v1438 = vpop.permute.xlu0 %1437
        %v1440 = vsel %vm953, %v1436, 0
        %v1443 = vand.u32 %v1438, %v1039
        %1445 = vmatpush.bf16.msra.mxu0 0
        %1446 = vmatpush.bf16.msra.mxu0 0
        %1447 = vmatpush.bf16.msra.mxu0 0
        %1448 = vmatpush.bf16.msra.mxu0 0
        %1449 = vmatpush.bf16.msra.mxu0 0
        %1450 = vmatpush.bf16.msra.mxu0 0
        %1451 = vmatpush.bf16.msra.mxu0 0
        %1452 = vmatpush.bf16.msra.mxu0 %v1443
        %1453 = vmatmul.bf16.gmra.mxu0 %v1440
        %v1454 = vpop.f32.mrf.mxu0
        %v1455 = vadd.f32 0.0, %v1454
        %v1456 = vpop.f32.mrf.mxu0
        %v1457 = vadd.f32 0.0, %v1456
        %1458 = vdwg.mxu0
        %v1461 = vunpack.c.l.b16 %v1396
        %v1462 = vunpack.c.l.b16 %v1397
        %v1463 = vpack.c.b16 %v1461, %v1427
        %v1464 = vpack.c.b16 %v1462, %v1462
        %v1465 = vrot.slane %v1463, 3
        %v1466 = vrot.slane %v1464, 3
        %v1467 = vsel %vm1096, %v1465, %v1466
        %1468 = vrot.lane.b32.xlu0 %v1198, 48
        %v1469 = vpop.permute.xlu0 %1468
        %v1471 = vsel %vm953, %v1467, 0
        %v1474 = vand.u32 %v1469, %v1039
        %1476 = vmatpush.bf16.msra.mxu0 0
        %1477 = vmatpush.bf16.msra.mxu0 0
        %1478 = vmatpush.bf16.msra.mxu0 0
        %1479 = vmatpush.bf16.msra.mxu0 0
        %1480 = vmatpush.bf16.msra.mxu0 0
        %1481 = vmatpush.bf16.msra.mxu0 0
        %1482 = vmatpush.bf16.msra.mxu0 0
        %1483 = vmatpush.bf16.msra.mxu0 %v1474
        %1484 = vmatmul.bf16.gmra.mxu0 %v1471
        %v1485 = vpop.f32.mrf.mxu0
        %v1486 = vadd.f32 0.0, %v1485
        %v1487 = vpop.f32.mrf.mxu0
        %v1488 = vadd.f32 0.0, %v1487
        %1489 = vdwg.mxu0
        %v1491 = vunpack.c.l.b16 %v1398
        %v1492 = vpack.c.b16 %v1491, %v1462
        %v1494 = vshrl.u32 %v1492, 16
        %v1496 = vshll.u32 %v1492, 16
        %v1498 = vrot.slane %v1496, 1
        %v1499 = vor.u32 %v1494, %v1498
        %1500 = vrot.lane.b32.xlu0 %v1198, 40
        %v1501 = vpop.permute.xlu0 %1500
        %v1503 = vsel %vm953, %v1499, 0
        %v1506 = vand.u32 %v1501, %v1039
        %1508 = vmatpush.bf16.msra.mxu0 0
        %1509 = vmatpush.bf16.msra.mxu0 0
        %1510 = vmatpush.bf16.msra.mxu0 0
        %1511 = vmatpush.bf16.msra.mxu0 0
        %1512 = vmatpush.bf16.msra.mxu0 0
        %1513 = vmatpush.bf16.msra.mxu0 0
        %1514 = vmatpush.bf16.msra.mxu0 0
        %1515 = vmatpush.bf16.msra.mxu0 %v1506
        %1516 = vmatmul.bf16.gmra.mxu0 %v1503
        %v1517 = vpop.f32.mrf.mxu0
        %v1518 = vadd.f32 0.0, %v1517
        %v1519 = vpop.f32.mrf.mxu0
        %v1520 = vadd.f32 0.0, %v1519
        %1521 = vdwg.mxu0
        %1524 = vrot.lane.b32.xlu0 %v1455, 8
        %v1525 = vpop.permute.xlu0 %1524
        %1526 = vrot.lane.b32.xlu0 %v1457, 8
        %v1527 = vpop.permute.xlu0 %1526
        %1532 = vrot.lane.b32.xlu0 %v1486, 16
        %v1533 = vpop.permute.xlu0 %1532
        %1534 = vrot.lane.b32.xlu0 %v1488, 16
        %v1535 = vpop.permute.xlu0 %1534
        %1540 = vrot.lane.b32.xlu0 %v1518, 24
        %v1541 = vpop.permute.xlu0 %1540
        %1542 = vrot.lane.b32.xlu0 %v1520, 24
        %v1543 = vpop.permute.xlu0 %1542
        %v1546 = vsel %vm823, %v1422, %v1525
        %v1547 = vsel %vm823, %v1424, %v1527
        %v1548 = vsel %vm1180, %v1546, %v1533
        %v1549 = vsel %vm1180, %v1547, %v1535
        %v1550 = vsel %vm1183, %v1548, %v1541
        %v1551 = vsel %vm1183, %v1549, %v1543
        %v1554 = vrot.slane %v1550, 5
        %v1555 = vrot.slane %v1551, 5
        %v1556 = vsel %vm918, %v1554, %v1555
        %v1559 = vsel %vm918, %v1185, %v1554
        %v1560 = vpack.c.bf16 %v1559, %v1184
        %v1561 = vpack.c.bf16 %v1556, %v1556
        %v1562 = vld [vmem:[%s722] sm:$0xf]
        %v1563 = vld [vmem:[%s722 + $0x4] sm:$0xf]
        %v1564 = vld [vmem:[%s722 + $0x8] sm:$0xf]
        %v1565 = vld [vmem:[%s722 + $0xc] sm:$0xf]
        %v1566 = vld [vmem:[%s725] sm:$0x1]
        %v1568 = vperm.slane %v1566, 0
        %v1574 = vunpack.c.l.b16 %v1562
        %v1575 = vunpack.c.l.b16 %v1563
        %v1576 = vunpack.c.l.b16 %v1564
        %v1577 = vunpack.c.l.b16 %v1565
        %v1578 = vpack.c.b16 %v1575, %v1574
        %v1579 = vpack.c.b16 %v1577, %v1576
        %v1583 = vsel %vm787, %v1560, 0
        %v1586 = vsel %vm787, %v1561, 0
        %1588 = vmatpush.bf16.msra.mxu0 0
        %1589 = vmatpush.bf16.msra.mxu0 0
        %1590 = vmatpush.bf16.msra.mxu0 0
        %1591 = vmatpush.bf16.msra.mxu0 0
        %1592 = vmatpush.bf16.msra.mxu0 0
        %1593 = vmatpush.bf16.msra.mxu0 0
        %1594 = vmatpush.bf16.msra.mxu0 %v1579
        %1595 = vmatpush.bf16.msra.mxu0 %v1578
        %1596 = vmatmul.bf16.gmra.mxu0 %v1583
        %v1597 = vpop.f32.mrf.mxu0
        %v1598 = vadd.f32 %v1568, %v1597
        %v1599 = vpop.f32.mrf.mxu0
        %v1600 = vadd.f32 %v1568, %v1599
        %1601 = vmatmul.bf16.gmra.mxu0 %v1586
        %v1602 = vpop.f32.mrf.mxu0
        %v1603 = vadd.f32 %v1568, %v1602
        %v1604 = vpop.f32.mrf.mxu0
        %1605 = vdwg.mxu0
        %v1606 = vadd.f32 %v762, %v1598
        %v1607 = vadd.f32 %v763, %v1600
        %v1608 = vadd.f32 %v764, %v1603
        %v1609 = vld [vmem:[%s728] sm:$0x1]
        %v1610 = vld [vmem:[%s619] sm:$0x1]
        %v1611 = vsel %vm787, %v1606, 0.0
        %1612 = vadd.xlane.f32.xlu0 %v1611
        %v1613 = vpop.xlane.xlu0 %1612
        %v1614 = vsel %vm787, %v1607, 0.0
        %1615 = vadd.xlane.f32.xlu0 %v1614
        %v1616 = vpop.xlane.xlu0 %1615
        %vm1617 = vcmask 259072
        %v1618 = vsel %vm1617, %v1608, 0.0
        %1619 = vadd.xlane.f32.xlu0 %v1618
        %v1620 = vpop.xlane.xlu0 %1619
        %v1621 = vrcp.pop 32.0
        %v1622 = vmul.f32 32.0, %v1621
        %v1623 = vsub.f32 1.0, %v1622
        %v1624 = vmul.f32 %v1621, %v1623
        %v1625 = vadd.f32 %v1621, %v1624
        %vm1626 = vweird.f32 %v1621
        %v1627 = vsel %vm1626, %v1621, %v1625
        %v1628 = vmul.f32 %v1613, %v1627
        %v1629 = vmul.f32 %v1616, %v1627
        %v1630 = vmul.f32 %v1620, %v1627
        %v1631 = vsub.f32 %v1606, %v1628
        %v1632 = vsub.f32 %v1607, %v1629
        %v1633 = vsub.f32 %v1608, %v1630
        %v1634 = vmul.f32 %v1631, %v1631
        %v1635 = vmul.f32 %v1632, %v1632
        %v1636 = vmul.f32 %v1633, %v1633
        %v1637 = vsel %vm787, %v1634, 0.0
        %1638 = vadd.xlane.f32.xlu0 %v1637
        %v1639 = vpop.xlane.xlu0 %1638
        %v1640 = vsel %vm787, %v1635, 0.0
        %1641 = vadd.xlane.f32.xlu0 %v1640
        %v1642 = vpop.xlane.xlu0 %1641
        %v1643 = vsel %vm1617, %v1636, 0.0
        %1644 = vadd.xlane.f32.xlu0 %v1643
        %v1645 = vpop.xlane.xlu0 %1644
        %v1646 = vmul.f32 %v1639, %v1627
        %v1647 = vmul.f32 %v1642, %v1627
        %v1648 = vmul.f32 %v1645, %v1627
        %v1649 = vadd.f32 %v1646, 1e-05
        %v1650 = vadd.f32 %v1647, 1e-05
        %v1651 = vadd.f32 %v1648, 1e-05
        %v1652 = vrsqrt.pop %v1649
        %v1653 = vmul.f32 %v1652, %v1649
        %v1654 = vmul.f32 %v1653, %v1652
        %v1655 = vmul.f32 0.5, %v1654
        %v1656 = vsub.f32 1.5, %v1655
        %v1657 = vmul.f32 %v1652, %v1656
        %vm1658 = vweird.f32 %v1649
        %vm1659 = vweird.f32 %v1652
        %vm1660 = vmor %vm1658, %vm1659
        %v1661 = vsel %vm1660, %v1652, %v1657
        %v1662 = vrsqrt.pop %v1650
        %v1663 = vmul.f32 %v1662, %v1650
        %v1664 = vmul.f32 %v1663, %v1662
        %v1665 = vmul.f32 0.5, %v1664
        %v1666 = vsub.f32 1.5, %v1665
        %v1667 = vmul.f32 %v1662, %v1666
        %vm1668 = vweird.f32 %v1650
        %vm1669 = vweird.f32 %v1662
        %vm1670 = vmor %vm1668, %vm1669
        %v1671 = vsel %vm1670, %v1662, %v1667
        %v1672 = vrsqrt.pop %v1651
        %v1673 = vmul.f32 %v1672, %v1651
        %v1674 = vmul.f32 %v1673, %v1672
        %v1675 = vmul.f32 0.5, %v1674
        %v1676 = vsub.f32 1.5, %v1675
        %v1677 = vmul.f32 %v1672, %v1676
        %vm1678 = vweird.f32 %v1651
        %vm1679 = vweird.f32 %v1672
        %vm1680 = vmor %vm1678, %vm1679
        %v1681 = vsel %vm1680, %v1672, %v1677
        %v1682 = vmul.f32 %v1631, %v1661
        %v1683 = vmul.f32 %v1632, %v1671
        %v1684 = vmul.f32 %v1633, %v1681
        %v1686 = vperm.slane %v1609, 0
        %v1688 = vmul.f32 %v1682, %v1686
        %v1689 = vmul.f32 %v1683, %v1686
        %v1690 = vmul.f32 %v1684, %v1686
        %v1692 = vperm.slane %v1610, 0
        %v1694 = vadd.f32 %v1688, %v1692
        %v1695 = vadd.f32 %v1689, %v1692
        %v1696 = vadd.f32 %v1690, %v1692
        %v1697 = vpack.c.bf16 %v1695, %v1694
        %v1698 = vpack.c.bf16 %v1696, %v1696
        %v1699 = vld [vmem:[%s733] sm:$0xf]
        %v1700 = vld [vmem:[%s733 + $0x4] sm:$0xf]
        %v1701 = vld [vmem:[%s733 + $0x8] sm:$0xf]
        %v1702 = vld [vmem:[%s733 + $0xc] sm:$0xf]
        %v1703 = vld [vmem:[%s736] sm:$0x1]
        %v1705 = vperm.slane %v1703, 0
        %v1711 = vunpack.c.l.b16 %v1699
        %v1712 = vunpack.c.l.b16 %v1700
        %v1713 = vunpack.c.l.b16 %v1701
        %v1714 = vunpack.c.l.b16 %v1702
        %v1715 = vpack.c.b16 %v1712, %v1711
        %v1716 = vpack.c.b16 %v1714, %v1713
        %v1720 = vsel %vm787, %v1697, 0
        %v1723 = vsel %vm787, %v1698, 0
        %1725 = vmatpush.bf16.msra.mxu0 0
        %1726 = vmatpush.bf16.msra.mxu0 0
        %1727 = vmatpush.bf16.msra.mxu0 0
        %1728 = vmatpush.bf16.msra.mxu0 0
        %1729 = vmatpush.bf16.msra.mxu0 0
        %1730 = vmatpush.bf16.msra.mxu0 0
        %1731 = vmatpush.bf16.msra.mxu0 %v1716
        %1732 = vmatpush.bf16.msra.mxu0 %v1715
        %1733 = vmatmul.bf16.gmra.mxu0 %v1720
        %v1734 = vpop.f32.mrf.mxu0
        %v1735 = vadd.f32 %v1705, %v1734
        %v1736 = vpop.f32.mrf.mxu0
        %v1737 = vadd.f32 %v1705, %v1736
        %1738 = vmatmul.bf16.gmra.mxu0 %v1723
        %v1739 = vpop.f32.mrf.mxu0
        %v1740 = vadd.f32 %v1705, %v1739
        %v1741 = vpop.f32.mrf.mxu0
        %1742 = vdwg.mxu0
        %v1743 = vmul.f32 %v1735, %v1735
        %v1744 = vmul.f32 %v1737, %v1737
        %v1745 = vmul.f32 %v1740, %v1740
        %v1746 = vmul.f32 %v1735, %v1743
        %v1747 = vmul.f32 %v1737, %v1744
        %v1748 = vmul.f32 %v1740, %v1745
        %v1749 = vmul.f32 %v1746, 0.044715
        %v1750 = vmul.f32 %v1747, 0.044715
        %v1751 = vmul.f32 %v1748, 0.044715
        %v1752 = vadd.f32 %v1735, %v1749
        %v1753 = vadd.f32 %v1737, %v1750
        %v1754 = vadd.f32 %v1740, %v1751
        %v1755 = vmul.f32 %v1752, 0.7978846
        %v1756 = vmul.f32 %v1753, 0.7978846
        %v1757 = vmul.f32 %v1754, 0.7978846
        %v1758 = vtanh.pop %v1755
        %v1759 = vtanh.pop %v1756
        %v1760 = vtanh.pop %v1757
        %v1761 = vadd.f32 %v1758, 1.0
        %v1762 = vadd.f32 %v1759, 1.0
        %v1763 = vadd.f32 %v1760, 1.0
        %v1764 = vmul.f32 %v1761, 0.5
        %v1765 = vmul.f32 %v1762, 0.5
        %v1766 = vmul.f32 %v1763, 0.5
        %v1767 = vmul.f32 %v1735, %v1764
        %v1768 = vmul.f32 %v1737, %v1765
        %v1769 = vmul.f32 %v1740, %v1766
        %v1770 = vpack.c.bf16 %v1768, %v1767
        %v1771 = vpack.c.bf16 %v1769, %v1769
        %v1772 = vld [vmem:[%s741] sm:$0xf]
        %v1773 = vld [vmem:[%s741 + $0x4] sm:$0xf]
        %v1774 = vld [vmem:[%s741 + $0x8] sm:$0xf]
        %v1775 = vld [vmem:[%s741 + $0xc] sm:$0xf]
        %v1776 = vld [vmem:[%s741 + $0x10] sm:$0xf]
        %v1777 = vld [vmem:[%s741 + $0x14] sm:$0xf]
        %v1778 = vld [vmem:[%s741 + $0x18] sm:$0xf]
        %v1779 = vld [vmem:[%s741 + $0x1c] sm:$0xf]
        %v1780 = vld [vmem:[%s744] sm:$0x1]
        %v1782 = vperm.slane %v1780, 0
        %v1792 = vunpack.c.l.b16 %v1772
        %v1793 = vunpack.c.l.b16 %v1773
        %v1794 = vunpack.c.l.b16 %v1774
        %v1795 = vunpack.c.l.b16 %v1775
        %v1796 = vunpack.c.l.b16 %v1776
        %v1797 = vunpack.c.l.b16 %v1777
        %v1798 = vunpack.c.l.b16 %v1778
        %v1799 = vunpack.c.l.b16 %v1779
        %v1800 = vpack.c.b16 %v1793, %v1792
        %v1801 = vpack.c.b16 %v1795, %v1794
        %v1802 = vpack.c.b16 %v1797, %v1796
        %v1803 = vpack.c.b16 %v1799, %v1798
        %vm1808 = vcmask 523264
        %v1810 = vsel %vm1808, %v1770, 0
        %v1813 = vsel %vm1808, %v1771, 0
        %1815 = vmatpush.bf16.msra.mxu0 0
        %1816 = vmatpush.bf16.msra.mxu0 0
        %1817 = vmatpush.bf16.msra.mxu0 0
        %1818 = vmatpush.bf16.msra.mxu0 0
        %1819 = vmatpush.bf16.msra.mxu0 %v1803
        %1820 = vmatpush.bf16.msra.mxu0 %v1802
        %1821 = vmatpush.bf16.msra.mxu0 %v1801
        %1822 = vmatpush.bf16.msra.mxu0 %v1800
        %1823 = vmatmul.bf16.gmra.mxu0 %v1810
        %v1824 = vpop.f32.mrf.mxu0
        %v1825 = vadd.f32 %v1782, %v1824
        %v1826 = vpop.f32.mrf.mxu0
        %v1827 = vadd.f32 %v1782, %v1826
        %1828 = vmatmul.bf16.gmra.mxu0 %v1813
        %v1829 = vpop.f32.mrf.mxu0
        %v1830 = vadd.f32 %v1782, %v1829
        %v1831 = vpop.f32.mrf.mxu0
        %1832 = vdwg.mxu0
        %v1833 = vadd.f32 %v1694, %v1825
        %v1834 = vadd.f32 %v1695, %v1827
        %v1835 = vadd.f32 %v1696, %v1830
        %v1836 = vld [vmem:[%s747] sm:$0x1]
        %v1837 = vld [vmem:[%s628] sm:$0x1]
        %v1838 = vsel %vm787, %v1833, 0.0
        %1839 = vadd.xlane.f32.xlu0 %v1838
        %v1840 = vpop.xlane.xlu0 %1839
        %v1841 = vsel %vm787, %v1834, 0.0
        %1842 = vadd.xlane.f32.xlu0 %v1841
        %v1843 = vpop.xlane.xlu0 %1842
        %v1844 = vsel %vm1617, %v1835, 0.0
        %1845 = vadd.xlane.f32.xlu0 %v1844
        %v1846 = vpop.xlane.xlu0 %1845
        %v1847 = vmul.f32 %v1840, %v1627
        %v1848 = vmul.f32 %v1843, %v1627
        %v1849 = vmul.f32 %v1846, %v1627
        %v1850 = vsub.f32 %v1833, %v1847
        %v1851 = vsub.f32 %v1834, %v1848
        %v1852 = vsub.f32 %v1835, %v1849
        %v1853 = vmul.f32 %v1850, %v1850
        %v1854 = vmul.f32 %v1851, %v1851
        %v1855 = vmul.f32 %v1852, %v1852
        %v1856 = vsel %vm787, %v1853, 0.0
        %1857 = vadd.xlane.f32.xlu0 %v1856
        %v1858 = vpop.xlane.xlu0 %1857
        %v1859 = vsel %vm787, %v1854, 0.0
        %1860 = vadd.xlane.f32.xlu0 %v1859
        %v1861 = vpop.xlane.xlu0 %1860
        %v1862 = vsel %vm1617, %v1855, 0.0
        %1863 = vadd.xlane.f32.xlu0 %v1862
        %v1864 = vpop.xlane.xlu0 %1863
        %v1865 = vmul.f32 %v1858, %v1627
        %v1866 = vmul.f32 %v1861, %v1627
        %v1867 = vmul.f32 %v1864, %v1627
        %v1868 = vadd.f32 %v1865, 1e-05
        %v1869 = vadd.f32 %v1866, 1e-05
        %v1870 = vadd.f32 %v1867, 1e-05
        %v1871 = vrsqrt.pop %v1868
        %v1872 = vmul.f32 %v1871, %v1868
        %v1873 = vmul.f32 %v1872, %v1871
        %v1874 = vmul.f32 0.5, %v1873
        %v1875 = vsub.f32 1.5, %v1874
        %v1876 = vmul.f32 %v1871, %v1875
        %vm1877 = vweird.f32 %v1868
        %vm1878 = vweird.f32 %v1871
        %vm1879 = vmor %vm1877, %vm1878
        %v1880 = vsel %vm1879, %v1871, %v1876
        %v1881 = vrsqrt.pop %v1869
        %v1882 = vmul.f32 %v1881, %v1869
        %v1883 = vmul.f32 %v1882, %v1881
        %v1884 = vmul.f32 0.5, %v1883
        %v1885 = vsub.f32 1.5, %v1884
        %v1886 = vmul.f32 %v1881, %v1885
        %vm1887 = vweird.f32 %v1869
        %vm1888 = vweird.f32 %v1881
        %vm1889 = vmor %vm1887, %vm1888
        %v1890 = vsel %vm1889, %v1881, %v1886
        %v1891 = vrsqrt.pop %v1870
        %v1892 = vmul.f32 %v1891, %v1870
        %v1893 = vmul.f32 %v1892, %v1891
        %v1894 = vmul.f32 0.5, %v1893
        %v1895 = vsub.f32 1.5, %v1894
        %v1896 = vmul.f32 %v1891, %v1895
        %vm1897 = vweird.f32 %v1870
        %vm1898 = vweird.f32 %v1891
        %vm1899 = vmor %vm1897, %vm1898
        %v1900 = vsel %vm1899, %v1891, %v1896
        %v1901 = vmul.f32 %v1850, %v1880
        %v1902 = vmul.f32 %v1851, %v1890
        %v1903 = vmul.f32 %v1852, %v1900
        %v1905 = vperm.slane %v1836, 0
        %v1907 = vmul.f32 %v1901, %v1905
        %v1908 = vmul.f32 %v1902, %v1905
        %v1909 = vmul.f32 %v1903, %v1905
        %v1911 = vperm.slane %v1837, 0
        %v1913 = vadd.f32 %v1907, %v1911
        %v1914 = vadd.f32 %v1908, %v1911
        %v1915 = vadd.f32 %v1909, %v1911
        %1916 = vst.msk [vmem:[#allocation10] sm:$0xff] %vm787, %v1913
        %1917 = vst.msk [vmem:[#allocation10 + $0x8] sm:$0xff] %vm787, %v1914
        %1918 = vst.msk [vmem:[#allocation10 + $0x10] sm:$0x3f] %vm1617, %v1915
        // Predicated region
        $region101: #{tpu_custom_call.1} parent=75 // pred_check
          %p1919 = pneg %p422
        $region102: #{tpu_custom_call.1} parent=75 // pred_check_branch
          %1921 = sbr.rel (%p1919) target = $region104
        $region103: #{tpu_custom_call.1} parent=75 // pred_region
          %s1922 = smul.u32 3, %s32
          %1924 = vsyncadd [#allocation4], 0
          %s1925 = smul.addr %s1922, 8
          %s1926 = scalar_lea.hbm %s14, %s1925
          %s1927 = sshll.u32 [#allocation10], 4
          %s1928 = int_to_ptr.vmem [resolvable:$true] %s1927
          %s1929 = sshll.u32 %s1926, 4
          %s1930 = int_to_ptr.hbm [resolvable:$true] %s1929
          %1935 = dma.vmem_to_hbm [thread:$0]  %s1928, 384, %s1930, [#allocation4], 128, 128, 8
        $region104: #{tpu_custom_call.1} parent=75 // pred_fallthru
          _
        // Predicated region
        $region105: #{tpu_custom_call.1} parent=75 // pred_check
          %p1936 = pneg %p422
        $region106: #{tpu_custom_call.1} parent=75 // pred_check_branch
          %1938 = sbr.rel (%p1936) target = $region108
        $region107: #{tpu_custom_call.1} parent=75 // pred_region
          %1940 = dma.done [#allocation4], 384
        $region108: #{tpu_custom_call.1} parent=75 // pred_fallthru
          _
      $region76: #{tpu_custom_call.1} parent=5 // pred_fallthru
        _
      %p1941 = scmp.le.s32.totalorder 2, %s23
      // Predicated region
      $region109: #{tpu_custom_call.1} parent=5 // pred_check
        %p1942 = pneg %p1941
      $region110: #{tpu_custom_call.1} parent=5 // pred_check_branch
        %1944 = sbr.rel (%p1942) target = $region112
      $region111: #{tpu_custom_call.1} parent=5 // pred_region
        %s1945 = ssub.s32 %s23, 2
      $region112: #{tpu_custom_call.1} parent=5 // pred_fallthru
        _
    $region6: #{tpu_custom_call.1} parent=1 // loop_footer
      %s27 = sadd.s32 1, %s23
    $region7: #{tpu_custom_call.1} parent=1 // loop_footer_branch
      %22 = sbr.rel target = $region3
    $region8: #{tpu_custom_call.1} parent=1 // loop_exit
      _
    %1946 = vsyncpa [#allocation3], 1
    %s1947 = scalar_lea.sflag [#allocation3], 1
    %1948 = vsyncpa %s1947, 1
    %1949 = vsyncpa [#allocation6], 1
    %1950 = vsyncpa [#allocation4], 1
    %s1951 = scalar_lea.sflag [#allocation4], 1
    %1952 = vsyncpa %s1951, 1

</llo_original>
